<compile_context>
chip_gen: v5e
topology: v5e:2x2
jax: 0.10.0
libtpu: 0.0.40
codegen_flags: <defaults>
</compile_context>

<pallas_src>
import functools
import math

import jax
import jax.numpy as jnp
from jax.experimental import pallas as pl
from jax.experimental.pallas import tpu as pltpu

N_FEATS = 4
KSIZE = 7
NUM_BIAS = 7  # b0, bd1..bd4, bp, b1

# (tap_col0, bias_col, axis[0=W,1=H], stride_is_W, dilation) for the 4 dw convs.
_DW_LAYERS = (
    (0, 1, 0, False, 1),    # (1,7)  dil 1
    (7, 2, 1, True, 1),     # (7,1)  dil 1
    (14, 3, 0, False, 3),   # (1,7)  dil 3
    (21, 4, 1, True, 3),    # (7,1)  dil 3
)


def _mask_table_order():
    """Canonical order of the unique (axis, offset) boundary masks."""
    order = []
    for (_c, _b, axis, _s, dil) in _DW_LAYERS:
        for k in range(KSIZE):
            off = (k - KSIZE // 2) * dil
            if off == 0:
                continue
            key = (axis, off)
            if key not in order:
                order.append(key)
    return order


def _erf(z):
    # Abramowitz & Stegun 7.1.26 polynomial (|err| < 1.5e-7); elementwise only.
    s = jnp.where(z >= 0.0, 1.0, -1.0)
    a = jnp.abs(z)
    # pl.reciprocal(approx=True) would move this to the EUP slot, but the extra
    # ~1e-4 relative error risks the 2e-4 parity bound -> keep the exact path.
    t = pl.reciprocal(1.0 + 0.3275911 * a, approx=False)
    poly = ((((1.061405429 * t - 1.453152027) * t + 1.421413741) * t
             - 0.284496736) * t + 0.254829592) * t
    return s * (1.0 - poly * jnp.exp(-a * a))


def _gelu_exact(z):
    # nn.GELU() default is the exact (erf-based) GELU.
    return 0.5 * z * (1.0 + _erf(z * 0.7071067811865476))


def _lskat_kernel(x_ref, wpw_ref, wdw_ref, bias_ref, mask_ref, out_ref, *, W):
    HW = x_ref.shape[1]
    mask_row = {key: i for i, key in enumerate(_mask_table_order())}

    wdw = wdw_ref[...]        # [RB, 4*KSIZE]  per-row depthwise taps
    bias = bias_ref[...]      # [RB, NUM_BIAS] per-row biases (columns)
    masks = mask_ref[...]     # [n_masks, HW]  0.0 / 1.0 boundary masks

    def pointwise(z, mat_i, bias_col):
        # 1x1 conv over packed rows == block-diagonal [RB,RB] matmul on the MXU.
        r = jnp.dot(wpw_ref[mat_i], z,
                    preferred_element_type=jnp.float32,
                    precision=jax.lax.Precision.HIGHEST)
        return r + bias[:, bias_col:bias_col + 1]

    def dw_conv(z, col0, bias_col, axis, stride, dil):
        # Centre tap (offset 0) initialises the accumulator; bias folded in.
        acc = z * wdw[:, col0 + 3:col0 + 4] + bias[:, bias_col:bias_col + 1]
        for k in range(KSIZE):
            if k == 3:
                continue
            off = (k - 3) * dil                                  # static int
            tap = wdw[:, col0 + k:col0 + k + 1]                  # [RB, 1]
            m_i = mask_row[(axis, off)]
            m = masks[m_i:m_i + 1, :]                            # [1, HW]
            shifted = pltpu.roll(z, shift=(-off * stride) % HW, axis=1)
            acc = acc + (shifted * m) * tap
        return acc

    v = x_ref[...].astype(jnp.float32)                           # [RB, HW]

    # conv0: 1x1 conv + GELU
    y0 = _gelu_exact(pointwise(v, 0, 0))

    # att: dw(1x7) -> dw(7x1) -> dw(1x7,d3) -> dw(7x1,d3) -> 1x1
    a = y0
    for (col0, bcol, axis, is_h, dil) in _DW_LAYERS:
        a = dw_conv(a, col0, bcol, axis, W if is_h else 1, dil)
    a = pointwise(a, 1, 5)

    # y0 * att(y0), then conv1 (1x1)
    out_ref[...] = pointwise(y0 * a, 2, 6).astype(out_ref.dtype)


def _choose_tb(B, C):
    """Images per grid step: RB=TB*C multiple of 8, RB<=128, >=2 steps if possible."""
    unit = 8 // math.gcd(8, C)                       # min TB giving 8-multiple rows
    cap = max(unit, (128 // C // unit) * unit) if C <= 128 else unit
    if B <= unit:
        return unit                                   # toy case: one packed step
    tb = max(unit, (((B + 1) // 2) // unit) * unit)   # keep >=2 grid steps (v7x)
    return min(cap, tb)


def _pack_params(p, tb):
    """Host-side packing into the kernel's row-packed layout."""
    f32 = jnp.float32
    eye = jnp.eye(tb, dtype=f32)
    wpw = jnp.stack([jnp.kron(eye, p["w0"].astype(f32)),     # conv0
                     jnp.kron(eye, p["wp"].astype(f32)),     # att pointwise
                     jnp.kron(eye, p["w1"].astype(f32))])    # conv1
    wdw = jnp.tile(jnp.concatenate(
        [p["wd1"], p["wd2"], p["wd3"], p["wd4"]], axis=1).astype(f32), (tb, 1))
    bias = jnp.tile(jnp.stack(
        [p["b0"], p["bd1"], p["bd2"], p["bd3"], p["bd4"], p["bp"], p["b1"]],
        axis=1).astype(f32), (tb, 1))
    return wpw, wdw, bias


def _build_masks(H, W):
    """[n_masks, HW] f32 table of the unique zero-padding boundary masks."""
    HW = H * W
    lane = jnp.arange(HW, dtype=jnp.int32)
    w_idx = lane % W
    h_idx = lane // W
    rows = []
    for axis, off in _mask_table_order():
        idx, limit = (w_idx, W) if axis == 0 else (h_idx, H)
        rows.append(((idx + off >= 0) & (idx + off < limit)).astype(jnp.float32))
    return jnp.stack(rows, axis=0)


def lskat_forward(x_nchw, params):
    B, C, H, W = x_nchw.shape
    HW = H * W
    tb = _choose_tb(B, C)
    rb = tb * C
    n_tiles = -(-B // tb)
    b_pad = n_tiles * tb

    xr = x_nchw.reshape(B * C, HW)              # pure reshape, no transpose
    if b_pad != B:
        xr = jnp.pad(xr, ((0, (b_pad - B) * C), (0, 0)))

    wpw, wdw, bias = _pack_params(params, tb)
    masks = _build_masks(H, W)

    act_spec = pl.BlockSpec((rb, HW), lambda i: (i, 0))
    const2 = lambda i: (0, 0)

    out = pl.pallas_call(
        functools.partial(_lskat_kernel, W=W),
        out_shape=jax.ShapeDtypeStruct((b_pad * C, HW), jnp.float32),
        grid=(n_tiles,),
        in_specs=[
            act_spec,                                       # activations
            pl.BlockSpec((3, rb, rb), lambda i: (0, 0, 0)),  # pointwise weights
            pl.BlockSpec((rb, 4 * KSIZE), const2),           # dw taps
            pl.BlockSpec((rb, NUM_BIAS), const2),            # biases
            pl.BlockSpec(masks.shape, const2),               # boundary masks
        ],
        out_specs=act_spec,
        compiler_params=pltpu.CompilerParams(
            dimension_semantics=("parallel",),   # megacore sharding on v7x
            vmem_limit_bytes=32 * 1024 * 1024,   # footprint ~1 MiB, safe everywhere
        ),
    )(xr, wpw, wdw, bias, masks)
    return out[:B * C].reshape(B, C, H, W)


@jax.jit
def lskat_apply(x_nchw, params):
    return lskat_forward(x_nchw, params)


def init_params(key, c):
    """Deterministic synthetic parameters in (squeezed) PyTorch weight shapes."""
    ks = jax.random.split(key, 14)
    nrm = lambda k, shape, s: jax.random.normal(k, shape, jnp.float32) * s
    return {
        "w0": nrm(ks[0], (c, c), 0.3),          # conv0   [Cout, Cin]
        "b0": nrm(ks[1], (c,), 0.1),
        "wd1": nrm(ks[2], (c, KSIZE), 0.2),     # dw (1,7) taps along W
        "bd1": nrm(ks[3], (c,), 0.1),
        "wd2": nrm(ks[4], (c, KSIZE), 0.2),     # dw (7,1) taps along H
        "bd2": nrm(ks[5], (c,), 0.1),
        "wd3": nrm(ks[6], (c, KSIZE), 0.2),     # dw (1,7) dil=3
        "bd3": nrm(ks[7], (c,), 0.1),
        "wd4": nrm(ks[8], (c, KSIZE), 0.2),     # dw (7,1) dil=3
        "bd4": nrm(ks[9], (c,), 0.1),
        "wp": nrm(ks[10], (c, c), 0.3),         # att pointwise
        "bp": nrm(ks[11], (c,), 0.1),
        "w1": nrm(ks[12], (c, c), 0.3),         # conv1
        "b1": nrm(ks[13], (c,), 0.1),
    }


def lskat_reference_nchw(x, p):
    """Pure-JAX reference (lax.conv_general_dilated) mirroring the PyTorch module."""
    C = x.shape[1]

    def pw(z, w, b):
        return jnp.einsum("dc,bchw->bdhw", w, z) + b.reshape(1, C, 1, 1)

    def gelu(z):
        return 0.5 * z * (1.0 + jax.scipy.special.erf(z / jnp.sqrt(2.0)))

    def dw(z, wt, b, axis, pad, dil):
        if axis == "w":
            rhs = wt.reshape(C, 1, 1, KSIZE)
            padding, rhs_dil = ((0, 0), (pad, pad)), (1, dil)
        else:
            rhs = wt.reshape(C, 1, KSIZE, 1)
            padding, rhs_dil = ((pad, pad), (0, 0)), (dil, 1)
        out = jax.lax.conv_general_dilated(
            z, rhs, window_strides=(1, 1), padding=padding,
            rhs_dilation=rhs_dil,
            dimension_numbers=("NCHW", "OIHW", "NCHW"),
            feature_group_count=C)
        return out + b.reshape(1, C, 1, 1)

    y0 = gelu(pw(x, p["w0"], p["b0"]))
    a = dw(y0, p["wd1"], p["bd1"], "w", 3, 1)
    a = dw(a, p["wd2"], p["bd2"], "h", 3, 1)
    a = dw(a, p["wd3"], p["bd3"], "w", 9, 3)
    a = dw(a, p["wd4"], p["bd4"], "h", 9, 3)
    a = pw(a, p["wp"], p["bp"])
    return pw(y0 * a, p["w1"], p["b1"])


if __name__ == "__main__":
    B, C, H, W = 2, N_FEATS, 16, 16
    key = jax.random.PRNGKey(0)
    kx, kp = jax.random.split(key)
    x = jax.random.normal(kx, (B, C, H, W), jnp.float32)   # NCHW, like PyTorch
    params = init_params(kp, C)

    out = jax.block_until_ready(lskat_apply(x, params))
    ref = lskat_reference_nchw(x, params)

    assert out.shape == (B, C, H, W), out.shape
    max_err = float(jnp.max(jnp.abs(out - ref)))
    if max_err > 2e-4:
        raise AssertionError(f"Pallas kernel mismatch vs reference: max_err={max_err}")
    print("KERNEL_OK")
</pallas_src>

<mosaic_0001>
module attributes {stable_mosaic.version = 11 : i64} {
  func.func @_lskat_kernel(%arg0: i32, %arg1: memref<8x256xf32, #tpu.memory_space<vmem>>, %arg2: memref<3x8x8xf32, #tpu.memory_space<vmem>>, %arg3: memref<8x28xf32, #tpu.memory_space<vmem>>, %arg4: memref<8x7xf32, #tpu.memory_space<vmem>>, %arg5: memref<20x256xf32, #tpu.memory_space<vmem>>, %arg6: memref<8x256xf32, #tpu.memory_space<vmem>>) attributes {dimension_semantics = [#tpu.dimension_semantics<parallel>], iteration_bounds = array<i64: 1>, scalar_prefetch = 0 : i64, scratch_operands = 0 : i64, tpu.core_type = #tpu.core_type<tc>, window_params = [{transform_indices = @transform_0, window_bounds = array<i64: 8, 256>}, {pipeline_mode = #tpu.pipeline_mode<synchronous>, transform_indices = @transform_1, window_bounds = array<i64: 3, 8, 8>}, {pipeline_mode = #tpu.pipeline_mode<synchronous>, transform_indices = @transform_2, window_bounds = array<i64: 8, 28>}, {pipeline_mode = #tpu.pipeline_mode<synchronous>, transform_indices = @transform_3, window_bounds = array<i64: 8, 7>}, {pipeline_mode = #tpu.pipeline_mode<synchronous>, transform_indices = @transform_4, window_bounds = array<i64: 20, 256>}, {transform_indices = @transform_5, window_bounds = array<i64: 8, 256>}]} {
    %c0 = arith.constant 0 : index
    %c0_0 = arith.constant 0 : index
    %0 = vector.load %arg3[%c0, %c0_0] : memref<8x28xf32, #tpu.memory_space<vmem>>, vector<8x28xf32>
    %c0_1 = arith.constant 0 : index
    %c0_2 = arith.constant 0 : index
    %1 = vector.load %arg4[%c0_1, %c0_2] : memref<8x7xf32, #tpu.memory_space<vmem>>, vector<8x7xf32>
    %c0_3 = arith.constant 0 : index
    %c0_4 = arith.constant 0 : index
    %2 = vector.load %arg5[%c0_3, %c0_4] : memref<20x256xf32, #tpu.memory_space<vmem>>, vector<20x256xf32>
    %c0_5 = arith.constant 0 : index
    %c0_6 = arith.constant 0 : index
    %3 = vector.load %arg1[%c0_5, %c0_6] : memref<8x256xf32, #tpu.memory_space<vmem>>, vector<8x256xf32>
    %c0_7 = arith.constant 0 : index
    %c0_8 = arith.constant 0 : index
    %c0_9 = arith.constant 0 : index
    %4 = vector.load %arg2[%c0_7, %c0_8, %c0_9] : memref<3x8x8xf32, #tpu.memory_space<vmem>>, vector<1x8x8xf32>
    %5 = vector.shape_cast %4 : vector<1x8x8xf32> to vector<8x8xf32>
    %cst = arith.constant dense<0.000000e+00> : vector<8x256xf32>
    %6 = tpu.matmul %5, %3, %cst {dimension_numbers = #tpu.dot_dimension_numbers<[1], [0], [0], [1], [0, 0, 1, 1], [], []>, precision = #tpu.contract_precision<fp32>} : vector<8x8xf32>, vector<8x256xf32>, vector<8x256xf32> -> vector<8x256xf32>
    %7 = vector.extract_strided_slice %1 {offsets = [0, 0], sizes = [8, 1], strides = [1, 1]} : vector<8x7xf32> to vector<8x1xf32>
    %8 = vector.broadcast %7 : vector<8x1xf32> to vector<8x256xf32>
    %9 = arith.addf %6, %8 : vector<8x256xf32>
    %cst_10 = arith.constant 5.000000e-01 : f32
    %10 = vector.broadcast %cst_10 : f32 to vector<8x256xf32>
    %11 = arith.mulf %10, %9 : vector<8x256xf32>
    %cst_11 = arith.constant 0.707106769 : f32
    %12 = vector.broadcast %cst_11 : f32 to vector<8x256xf32>
    %13 = arith.mulf %9, %12 : vector<8x256xf32>
    %cst_12 = arith.constant 0.000000e+00 : f32
    %14 = vector.broadcast %cst_12 : f32 to vector<8x256xf32>
    %15 = arith.cmpf oge, %13, %14 : vector<8x256xf32>
    %cst_13 = arith.constant 1.000000e+00 : f32
    %cst_14 = arith.constant -1.000000e+00 : f32
    %16 = vector.broadcast %cst_13 : f32 to vector<8x256xf32>
    %17 = vector.broadcast %cst_14 : f32 to vector<8x256xf32>
    %18 = arith.select %15, %16, %17 : vector<8x256xi1>, vector<8x256xf32>
    %19 = math.absf %13 : vector<8x256xf32>
    %cst_15 = arith.constant 0.327591091 : f32
    %20 = vector.broadcast %cst_15 : f32 to vector<8x256xf32>
    %21 = arith.mulf %20, %19 : vector<8x256xf32>
    %cst_16 = arith.constant 1.000000e+00 : f32
    %22 = vector.broadcast %cst_16 : f32 to vector<8x256xf32>
    %23 = arith.addf %22, %21 : vector<8x256xf32>
    %24 = tpu.reciprocal %23 : vector<8x256xf32> -> vector<8x256xf32>
    %cst_17 = arith.constant 1.06140542 : f32
    %25 = vector.broadcast %cst_17 : f32 to vector<8x256xf32>
    %26 = arith.mulf %25, %24 : vector<8x256xf32>
    %cst_18 = arith.constant 1.45315206 : f32
    %27 = vector.broadcast %cst_18 : f32 to vector<8x256xf32>
    %28 = arith.subf %26, %27 : vector<8x256xf32>
    %29 = arith.mulf %28, %24 : vector<8x256xf32>
    %cst_19 = arith.constant 1.42141378 : f32
    %30 = vector.broadcast %cst_19 : f32 to vector<8x256xf32>
    %31 = arith.addf %29, %30 : vector<8x256xf32>
    %32 = arith.mulf %31, %24 : vector<8x256xf32>
    %cst_20 = arith.constant 0.284496725 : f32
    %33 = vector.broadcast %cst_20 : f32 to vector<8x256xf32>
    %34 = arith.subf %32, %33 : vector<8x256xf32>
    %35 = arith.mulf %34, %24 : vector<8x256xf32>
    %cst_21 = arith.constant 0.254829586 : f32
    %36 = vector.broadcast %cst_21 : f32 to vector<8x256xf32>
    %37 = arith.addf %35, %36 : vector<8x256xf32>
    %38 = arith.mulf %37, %24 : vector<8x256xf32>
    %cst_22 = arith.constant 0.000000e+00 : f32
    %39 = vector.broadcast %cst_22 : f32 to vector<8x256xf32>
    %40 = arith.subf %39, %19 : vector<8x256xf32>
    %41 = arith.mulf %40, %19 : vector<8x256xf32>
    %42 = math.exp %41 : vector<8x256xf32>
    %43 = arith.mulf %38, %42 : vector<8x256xf32>
    %cst_23 = arith.constant 1.000000e+00 : f32
    %44 = vector.broadcast %cst_23 : f32 to vector<8x256xf32>
    %45 = arith.subf %44, %43 : vector<8x256xf32>
    %46 = arith.mulf %18, %45 : vector<8x256xf32>
    %cst_24 = arith.constant 1.000000e+00 : f32
    %47 = vector.broadcast %cst_24 : f32 to vector<8x256xf32>
    %48 = arith.addf %47, %46 : vector<8x256xf32>
    %49 = arith.mulf %11, %48 : vector<8x256xf32>
    %50 = vector.extract_strided_slice %0 {offsets = [0, 3], sizes = [8, 1], strides = [1, 1]} : vector<8x28xf32> to vector<8x1xf32>
    %51 = vector.broadcast %50 : vector<8x1xf32> to vector<8x256xf32>
    %52 = arith.mulf %49, %51 : vector<8x256xf32>
    %53 = vector.extract_strided_slice %1 {offsets = [0, 1], sizes = [8, 1], strides = [1, 1]} : vector<8x7xf32> to vector<8x1xf32>
    %54 = vector.broadcast %53 : vector<8x1xf32> to vector<8x256xf32>
    %55 = arith.addf %52, %54 : vector<8x256xf32>
    %56 = vector.extract_strided_slice %0 {offsets = [0, 0], sizes = [8, 1], strides = [1, 1]} : vector<8x28xf32> to vector<8x1xf32>
    %57 = vector.extract_strided_slice %2 {offsets = [0, 0], sizes = [1, 256], strides = [1, 1]} : vector<20x256xf32> to vector<1x256xf32>
    %c3_i32 = arith.constant 3 : i32
    %58 = tpu.dynamic_rotate %49 by %c3_i32 dim 1 : vector<8x256xf32>, i32 -> vector<8x256xf32>
    %59 = vector.broadcast %57 : vector<1x256xf32> to vector<8x256xf32>
    %60 = arith.mulf %58, %59 : vector<8x256xf32>
    %61 = vector.broadcast %56 : vector<8x1xf32> to vector<8x256xf32>
    %62 = arith.mulf %60, %61 : vector<8x256xf32>
    %63 = arith.addf %55, %62 : vector<8x256xf32>
    %64 = vector.extract_strided_slice %0 {offsets = [0, 1], sizes = [8, 1], strides = [1, 1]} : vector<8x28xf32> to vector<8x1xf32>
    %65 = vector.extract_strided_slice %2 {offsets = [1, 0], sizes = [1, 256], strides = [1, 1]} : vector<20x256xf32> to vector<1x256xf32>
    %c2_i32 = arith.constant 2 : i32
    %66 = tpu.dynamic_rotate %49 by %c2_i32 dim 1 : vector<8x256xf32>, i32 -> vector<8x256xf32>
    %67 = vector.broadcast %65 : vector<1x256xf32> to vector<8x256xf32>
    %68 = arith.mulf %66, %67 : vector<8x256xf32>
    %69 = vector.broadcast %64 : vector<8x1xf32> to vector<8x256xf32>
    %70 = arith.mulf %68, %69 : vector<8x256xf32>
    %71 = arith.addf %63, %70 : vector<8x256xf32>
    %72 = vector.extract_strided_slice %0 {offsets = [0, 2], sizes = [8, 1], strides = [1, 1]} : vector<8x28xf32> to vector<8x1xf32>
    %73 = vector.extract_strided_slice %2 {offsets = [2, 0], sizes = [1, 256], strides = [1, 1]} : vector<20x256xf32> to vector<1x256xf32>
    %c1_i32 = arith.constant 1 : i32
    %74 = tpu.dynamic_rotate %49 by %c1_i32 dim 1 : vector<8x256xf32>, i32 -> vector<8x256xf32>
    %75 = vector.broadcast %73 : vector<1x256xf32> to vector<8x256xf32>
    %76 = arith.mulf %74, %75 : vector<8x256xf32>
    %77 = vector.broadcast %72 : vector<8x1xf32> to vector<8x256xf32>
    %78 = arith.mulf %76, %77 : vector<8x256xf32>
    %79 = arith.addf %71, %78 : vector<8x256xf32>
    %80 = vector.extract_strided_slice %0 {offsets = [0, 4], sizes = [8, 1], strides = [1, 1]} : vector<8x28xf32> to vector<8x1xf32>
    %81 = vector.extract_strided_slice %2 {offsets = [3, 0], sizes = [1, 256], strides = [1, 1]} : vector<20x256xf32> to vector<1x256xf32>
    %c255_i32 = arith.constant 255 : i32
    %82 = tpu.dynamic_rotate %49 by %c255_i32 dim 1 : vector<8x256xf32>, i32 -> vector<8x256xf32>
    %83 = vector.broadcast %81 : vector<1x256xf32> to vector<8x256xf32>
    %84 = arith.mulf %82, %83 : vector<8x256xf32>
    %85 = vector.broadcast %80 : vector<8x1xf32> to vector<8x256xf32>
    %86 = arith.mulf %84, %85 : vector<8x256xf32>
    %87 = arith.addf %79, %86 : vector<8x256xf32>
    %88 = vector.extract_strided_slice %0 {offsets = [0, 5], sizes = [8, 1], strides = [1, 1]} : vector<8x28xf32> to vector<8x1xf32>
    %89 = vector.extract_strided_slice %2 {offsets = [4, 0], sizes = [1, 256], strides = [1, 1]} : vector<20x256xf32> to vector<1x256xf32>
    %c254_i32 = arith.constant 254 : i32
    %90 = tpu.dynamic_rotate %49 by %c254_i32 dim 1 : vector<8x256xf32>, i32 -> vector<8x256xf32>
    %91 = vector.broadcast %89 : vector<1x256xf32> to vector<8x256xf32>
    %92 = arith.mulf %90, %91 : vector<8x256xf32>
    %93 = vector.broadcast %88 : vector<8x1xf32> to vector<8x256xf32>
    %94 = arith.mulf %92, %93 : vector<8x256xf32>
    %95 = arith.addf %87, %94 : vector<8x256xf32>
    %96 = vector.extract_strided_slice %0 {offsets = [0, 6], sizes = [8, 1], strides = [1, 1]} : vector<8x28xf32> to vector<8x1xf32>
    %97 = vector.extract_strided_slice %2 {offsets = [5, 0], sizes = [1, 256], strides = [1, 1]} : vector<20x256xf32> to vector<1x256xf32>
    %c253_i32 = arith.constant 253 : i32
    %98 = tpu.dynamic_rotate %49 by %c253_i32 dim 1 : vector<8x256xf32>, i32 -> vector<8x256xf32>
    %99 = vector.broadcast %97 : vector<1x256xf32> to vector<8x256xf32>
    %100 = arith.mulf %98, %99 : vector<8x256xf32>
    %101 = vector.broadcast %96 : vector<8x1xf32> to vector<8x256xf32>
    %102 = arith.mulf %100, %101 : vector<8x256xf32>
    %103 = arith.addf %95, %102 : vector<8x256xf32>
    %104 = vector.extract_strided_slice %0 {offsets = [0, 10], sizes = [8, 1], strides = [1, 1]} : vector<8x28xf32> to vector<8x1xf32>
    %105 = vector.broadcast %104 : vector<8x1xf32> to vector<8x256xf32>
    %106 = arith.mulf %103, %105 : vector<8x256xf32>
    %107 = vector.extract_strided_slice %1 {offsets = [0, 2], sizes = [8, 1], strides = [1, 1]} : vector<8x7xf32> to vector<8x1xf32>
    %108 = vector.broadcast %107 : vector<8x1xf32> to vector<8x256xf32>
    %109 = arith.addf %106, %108 : vector<8x256xf32>
    %110 = vector.extract_strided_slice %0 {offsets = [0, 7], sizes = [8, 1], strides = [1, 1]} : vector<8x28xf32> to vector<8x1xf32>
    %111 = vector.extract_strided_slice %2 {offsets = [6, 0], sizes = [1, 256], strides = [1, 1]} : vector<20x256xf32> to vector<1x256xf32>
    %c48_i32 = arith.constant 48 : i32
    %112 = tpu.dynamic_rotate %103 by %c48_i32 dim 1 : vector<8x256xf32>, i32 -> vector<8x256xf32>
    %113 = vector.broadcast %111 : vector<1x256xf32> to vector<8x256xf32>
    %114 = arith.mulf %112, %113 : vector<8x256xf32>
    %115 = vector.broadcast %110 : vector<8x1xf32> to vector<8x256xf32>
    %116 = arith.mulf %114, %115 : vector<8x256xf32>
    %117 = arith.addf %109, %116 : vector<8x256xf32>
    %118 = vector.extract_strided_slice %0 {offsets = [0, 8], sizes = [8, 1], strides = [1, 1]} : vector<8x28xf32> to vector<8x1xf32>
    %119 = vector.extract_strided_slice %2 {offsets = [7, 0], sizes = [1, 256], strides = [1, 1]} : vector<20x256xf32> to vector<1x256xf32>
    %c32_i32 = arith.constant 32 : i32
    %120 = tpu.dynamic_rotate %103 by %c32_i32 dim 1 : vector<8x256xf32>, i32 -> vector<8x256xf32>
    %121 = vector.broadcast %119 : vector<1x256xf32> to vector<8x256xf32>
    %122 = arith.mulf %120, %121 : vector<8x256xf32>
    %123 = vector.broadcast %118 : vector<8x1xf32> to vector<8x256xf32>
    %124 = arith.mulf %122, %123 : vector<8x256xf32>
    %125 = arith.addf %117, %124 : vector<8x256xf32>
    %126 = vector.extract_strided_slice %0 {offsets = [0, 9], sizes = [8, 1], strides = [1, 1]} : vector<8x28xf32> to vector<8x1xf32>
    %127 = vector.extract_strided_slice %2 {offsets = [8, 0], sizes = [1, 256], strides = [1, 1]} : vector<20x256xf32> to vector<1x256xf32>
    %c16_i32 = arith.constant 16 : i32
    %128 = tpu.dynamic_rotate %103 by %c16_i32 dim 1 : vector<8x256xf32>, i32 -> vector<8x256xf32>
    %129 = vector.broadcast %127 : vector<1x256xf32> to vector<8x256xf32>
    %130 = arith.mulf %128, %129 : vector<8x256xf32>
    %131 = vector.broadcast %126 : vector<8x1xf32> to vector<8x256xf32>
    %132 = arith.mulf %130, %131 : vector<8x256xf32>
    %133 = arith.addf %125, %132 : vector<8x256xf32>
    %134 = vector.extract_strided_slice %0 {offsets = [0, 11], sizes = [8, 1], strides = [1, 1]} : vector<8x28xf32> to vector<8x1xf32>
    %135 = vector.extract_strided_slice %2 {offsets = [9, 0], sizes = [1, 256], strides = [1, 1]} : vector<20x256xf32> to vector<1x256xf32>
    %c240_i32 = arith.constant 240 : i32
    %136 = tpu.dynamic_rotate %103 by %c240_i32 dim 1 : vector<8x256xf32>, i32 -> vector<8x256xf32>
    %137 = vector.broadcast %135 : vector<1x256xf32> to vector<8x256xf32>
    %138 = arith.mulf %136, %137 : vector<8x256xf32>
    %139 = vector.broadcast %134 : vector<8x1xf32> to vector<8x256xf32>
    %140 = arith.mulf %138, %139 : vector<8x256xf32>
    %141 = arith.addf %133, %140 : vector<8x256xf32>
    %142 = vector.extract_strided_slice %0 {offsets = [0, 12], sizes = [8, 1], strides = [1, 1]} : vector<8x28xf32> to vector<8x1xf32>
    %143 = vector.extract_strided_slice %2 {offsets = [10, 0], sizes = [1, 256], strides = [1, 1]} : vector<20x256xf32> to vector<1x256xf32>
    %c224_i32 = arith.constant 224 : i32
    %144 = tpu.dynamic_rotate %103 by %c224_i32 dim 1 : vector<8x256xf32>, i32 -> vector<8x256xf32>
    %145 = vector.broadcast %143 : vector<1x256xf32> to vector<8x256xf32>
    %146 = arith.mulf %144, %145 : vector<8x256xf32>
    %147 = vector.broadcast %142 : vector<8x1xf32> to vector<8x256xf32>
    %148 = arith.mulf %146, %147 : vector<8x256xf32>
    %149 = arith.addf %141, %148 : vector<8x256xf32>
    %150 = vector.extract_strided_slice %0 {offsets = [0, 13], sizes = [8, 1], strides = [1, 1]} : vector<8x28xf32> to vector<8x1xf32>
    %151 = vector.extract_strided_slice %2 {offsets = [11, 0], sizes = [1, 256], strides = [1, 1]} : vector<20x256xf32> to vector<1x256xf32>
    %c208_i32 = arith.constant 208 : i32
    %152 = tpu.dynamic_rotate %103 by %c208_i32 dim 1 : vector<8x256xf32>, i32 -> vector<8x256xf32>
    %153 = vector.broadcast %151 : vector<1x256xf32> to vector<8x256xf32>
    %154 = arith.mulf %152, %153 : vector<8x256xf32>
    %155 = vector.broadcast %150 : vector<8x1xf32> to vector<8x256xf32>
    %156 = arith.mulf %154, %155 : vector<8x256xf32>
    %157 = arith.addf %149, %156 : vector<8x256xf32>
    %158 = vector.extract_strided_slice %0 {offsets = [0, 17], sizes = [8, 1], strides = [1, 1]} : vector<8x28xf32> to vector<8x1xf32>
    %159 = vector.broadcast %158 : vector<8x1xf32> to vector<8x256xf32>
    %160 = arith.mulf %157, %159 : vector<8x256xf32>
    %161 = vector.extract_strided_slice %1 {offsets = [0, 3], sizes = [8, 1], strides = [1, 1]} : vector<8x7xf32> to vector<8x1xf32>
    %162 = vector.broadcast %161 : vector<8x1xf32> to vector<8x256xf32>
    %163 = arith.addf %160, %162 : vector<8x256xf32>
    %164 = vector.extract_strided_slice %0 {offsets = [0, 14], sizes = [8, 1], strides = [1, 1]} : vector<8x28xf32> to vector<8x1xf32>
    %165 = vector.extract_strided_slice %2 {offsets = [12, 0], sizes = [1, 256], strides = [1, 1]} : vector<20x256xf32> to vector<1x256xf32>
    %c9_i32 = arith.constant 9 : i32
    %166 = tpu.dynamic_rotate %157 by %c9_i32 dim 1 : vector<8x256xf32>, i32 -> vector<8x256xf32>
    %167 = vector.broadcast %165 : vector<1x256xf32> to vector<8x256xf32>
    %168 = arith.mulf %166, %167 : vector<8x256xf32>
    %169 = vector.broadcast %164 : vector<8x1xf32> to vector<8x256xf32>
    %170 = arith.mulf %168, %169 : vector<8x256xf32>
    %171 = arith.addf %163, %170 : vector<8x256xf32>
    %172 = vector.extract_strided_slice %0 {offsets = [0, 15], sizes = [8, 1], strides = [1, 1]} : vector<8x28xf32> to vector<8x1xf32>
    %173 = vector.extract_strided_slice %2 {offsets = [13, 0], sizes = [1, 256], strides = [1, 1]} : vector<20x256xf32> to vector<1x256xf32>
    %c6_i32 = arith.constant 6 : i32
    %174 = tpu.dynamic_rotate %157 by %c6_i32 dim 1 : vector<8x256xf32>, i32 -> vector<8x256xf32>
    %175 = vector.broadcast %173 : vector<1x256xf32> to vector<8x256xf32>
    %176 = arith.mulf %174, %175 : vector<8x256xf32>
    %177 = vector.broadcast %172 : vector<8x1xf32> to vector<8x256xf32>
    %178 = arith.mulf %176, %177 : vector<8x256xf32>
    %179 = arith.addf %171, %178 : vector<8x256xf32>
    %180 = vector.extract_strided_slice %0 {offsets = [0, 16], sizes = [8, 1], strides = [1, 1]} : vector<8x28xf32> to vector<8x1xf32>
    %181 = vector.extract_strided_slice %2 {offsets = [0, 0], sizes = [1, 256], strides = [1, 1]} : vector<20x256xf32> to vector<1x256xf32>
    %c3_i32_25 = arith.constant 3 : i32
    %182 = tpu.dynamic_rotate %157 by %c3_i32_25 dim 1 : vector<8x256xf32>, i32 -> vector<8x256xf32>
    %183 = vector.broadcast %181 : vector<1x256xf32> to vector<8x256xf32>
    %184 = arith.mulf %182, %183 : vector<8x256xf32>
    %185 = vector.broadcast %180 : vector<8x1xf32> to vector<8x256xf32>
    %186 = arith.mulf %184, %185 : vector<8x256xf32>
    %187 = arith.addf %179, %186 : vector<8x256xf32>
    %188 = vector.extract_strided_slice %0 {offsets = [0, 18], sizes = [8, 1], strides = [1, 1]} : vector<8x28xf32> to vector<8x1xf32>
    %189 = vector.extract_strided_slice %2 {offsets = [5, 0], sizes = [1, 256], strides = [1, 1]} : vector<20x256xf32> to vector<1x256xf32>
    %c253_i32_26 = arith.constant 253 : i32
    %190 = tpu.dynamic_rotate %157 by %c253_i32_26 dim 1 : vector<8x256xf32>, i32 -> vector<8x256xf32>
    %191 = vector.broadcast %189 : vector<1x256xf32> to vector<8x256xf32>
    %192 = arith.mulf %190, %191 : vector<8x256xf32>
    %193 = vector.broadcast %188 : vector<8x1xf32> to vector<8x256xf32>
    %194 = arith.mulf %192, %193 : vector<8x256xf32>
    %195 = arith.addf %187, %194 : vector<8x256xf32>
    %196 = vector.extract_strided_slice %0 {offsets = [0, 19], sizes = [8, 1], strides = [1, 1]} : vector<8x28xf32> to vector<8x1xf32>
    %197 = vector.extract_strided_slice %2 {offsets = [14, 0], sizes = [1, 256], strides = [1, 1]} : vector<20x256xf32> to vector<1x256xf32>
    %c250_i32 = arith.constant 250 : i32
    %198 = tpu.dynamic_rotate %157 by %c250_i32 dim 1 : vector<8x256xf32>, i32 -> vector<8x256xf32>
    %199 = vector.broadcast %197 : vector<1x256xf32> to vector<8x256xf32>
    %200 = arith.mulf %198, %199 : vector<8x256xf32>
    %201 = vector.broadcast %196 : vector<8x1xf32> to vector<8x256xf32>
    %202 = arith.mulf %200, %201 : vector<8x256xf32>
    %203 = arith.addf %195, %202 : vector<8x256xf32>
    %204 = vector.extract_strided_slice %0 {offsets = [0, 20], sizes = [8, 1], strides = [1, 1]} : vector<8x28xf32> to vector<8x1xf32>
    %205 = vector.extract_strided_slice %2 {offsets = [15, 0], sizes = [1, 256], strides = [1, 1]} : vector<20x256xf32> to vector<1x256xf32>
    %c247_i32 = arith.constant 247 : i32
    %206 = tpu.dynamic_rotate %157 by %c247_i32 dim 1 : vector<8x256xf32>, i32 -> vector<8x256xf32>
    %207 = vector.broadcast %205 : vector<1x256xf32> to vector<8x256xf32>
    %208 = arith.mulf %206, %207 : vector<8x256xf32>
    %209 = vector.broadcast %204 : vector<8x1xf32> to vector<8x256xf32>
    %210 = arith.mulf %208, %209 : vector<8x256xf32>
    %211 = arith.addf %203, %210 : vector<8x256xf32>
    %212 = vector.extract_strided_slice %0 {offsets = [0, 24], sizes = [8, 1], strides = [1, 1]} : vector<8x28xf32> to vector<8x1xf32>
    %213 = vector.broadcast %212 : vector<8x1xf32> to vector<8x256xf32>
    %214 = arith.mulf %211, %213 : vector<8x256xf32>
    %215 = vector.extract_strided_slice %1 {offsets = [0, 4], sizes = [8, 1], strides = [1, 1]} : vector<8x7xf32> to vector<8x1xf32>
    %216 = vector.broadcast %215 : vector<8x1xf32> to vector<8x256xf32>
    %217 = arith.addf %214, %216 : vector<8x256xf32>
    %218 = vector.extract_strided_slice %0 {offsets = [0, 21], sizes = [8, 1], strides = [1, 1]} : vector<8x28xf32> to vector<8x1xf32>
    %219 = vector.extract_strided_slice %2 {offsets = [16, 0], sizes = [1, 256], strides = [1, 1]} : vector<20x256xf32> to vector<1x256xf32>
    %c144_i32 = arith.constant 144 : i32
    %220 = tpu.dynamic_rotate %211 by %c144_i32 dim 1 : vector<8x256xf32>, i32 -> vector<8x256xf32>
    %221 = vector.broadcast %219 : vector<1x256xf32> to vector<8x256xf32>
    %222 = arith.mulf %220, %221 : vector<8x256xf32>
    %223 = vector.broadcast %218 : vector<8x1xf32> to vector<8x256xf32>
    %224 = arith.mulf %222, %223 : vector<8x256xf32>
    %225 = arith.addf %217, %224 : vector<8x256xf32>
    %226 = vector.extract_strided_slice %0 {offsets = [0, 22], sizes = [8, 1], strides = [1, 1]} : vector<8x28xf32> to vector<8x1xf32>
    %227 = vector.extract_strided_slice %2 {offsets = [17, 0], sizes = [1, 256], strides = [1, 1]} : vector<20x256xf32> to vector<1x256xf32>
    %c96_i32 = arith.constant 96 : i32
    %228 = tpu.dynamic_rotate %211 by %c96_i32 dim 1 : vector<8x256xf32>, i32 -> vector<8x256xf32>
    %229 = vector.broadcast %227 : vector<1x256xf32> to vector<8x256xf32>
    %230 = arith.mulf %228, %229 : vector<8x256xf32>
    %231 = vector.broadcast %226 : vector<8x1xf32> to vector<8x256xf32>
    %232 = arith.mulf %230, %231 : vector<8x256xf32>
    %233 = arith.addf %225, %232 : vector<8x256xf32>
    %234 = vector.extract_strided_slice %0 {offsets = [0, 23], sizes = [8, 1], strides = [1, 1]} : vector<8x28xf32> to vector<8x1xf32>
    %235 = vector.extract_strided_slice %2 {offsets = [6, 0], sizes = [1, 256], strides = [1, 1]} : vector<20x256xf32> to vector<1x256xf32>
    %c48_i32_27 = arith.constant 48 : i32
    %236 = tpu.dynamic_rotate %211 by %c48_i32_27 dim 1 : vector<8x256xf32>, i32 -> vector<8x256xf32>
    %237 = vector.broadcast %235 : vector<1x256xf32> to vector<8x256xf32>
    %238 = arith.mulf %236, %237 : vector<8x256xf32>
    %239 = vector.broadcast %234 : vector<8x1xf32> to vector<8x256xf32>
    %240 = arith.mulf %238, %239 : vector<8x256xf32>
    %241 = arith.addf %233, %240 : vector<8x256xf32>
    %242 = vector.extract_strided_slice %0 {offsets = [0, 25], sizes = [8, 1], strides = [1, 1]} : vector<8x28xf32> to vector<8x1xf32>
    %243 = vector.extract_strided_slice %2 {offsets = [11, 0], sizes = [1, 256], strides = [1, 1]} : vector<20x256xf32> to vector<1x256xf32>
    %c208_i32_28 = arith.constant 208 : i32
    %244 = tpu.dynamic_rotate %211 by %c208_i32_28 dim 1 : vector<8x256xf32>, i32 -> vector<8x256xf32>
    %245 = vector.broadcast %243 : vector<1x256xf32> to vector<8x256xf32>
    %246 = arith.mulf %244, %245 : vector<8x256xf32>
    %247 = vector.broadcast %242 : vector<8x1xf32> to vector<8x256xf32>
    %248 = arith.mulf %246, %247 : vector<8x256xf32>
    %249 = arith.addf %241, %248 : vector<8x256xf32>
    %250 = vector.extract_strided_slice %0 {offsets = [0, 26], sizes = [8, 1], strides = [1, 1]} : vector<8x28xf32> to vector<8x1xf32>
    %251 = vector.extract_strided_slice %2 {offsets = [18, 0], sizes = [1, 256], strides = [1, 1]} : vector<20x256xf32> to vector<1x256xf32>
    %c160_i32 = arith.constant 160 : i32
    %252 = tpu.dynamic_rotate %211 by %c160_i32 dim 1 : vector<8x256xf32>, i32 -> vector<8x256xf32>
    %253 = vector.broadcast %251 : vector<1x256xf32> to vector<8x256xf32>
    %254 = arith.mulf %252, %253 : vector<8x256xf32>
    %255 = vector.broadcast %250 : vector<8x1xf32> to vector<8x256xf32>
    %256 = arith.mulf %254, %255 : vector<8x256xf32>
    %257 = arith.addf %249, %256 : vector<8x256xf32>
    %258 = vector.extract_strided_slice %0 {offsets = [0, 27], sizes = [8, 1], strides = [1, 1]} : vector<8x28xf32> to vector<8x1xf32>
    %259 = vector.extract_strided_slice %2 {offsets = [19, 0], sizes = [1, 256], strides = [1, 1]} : vector<20x256xf32> to vector<1x256xf32>
    %c112_i32 = arith.constant 112 : i32
    %260 = tpu.dynamic_rotate %211 by %c112_i32 dim 1 : vector<8x256xf32>, i32 -> vector<8x256xf32>
    %261 = vector.broadcast %259 : vector<1x256xf32> to vector<8x256xf32>
    %262 = arith.mulf %260, %261 : vector<8x256xf32>
    %263 = vector.broadcast %258 : vector<8x1xf32> to vector<8x256xf32>
    %264 = arith.mulf %262, %263 : vector<8x256xf32>
    %265 = arith.addf %257, %264 : vector<8x256xf32>
    %c1 = arith.constant 1 : index
    %c0_29 = arith.constant 0 : index
    %c0_30 = arith.constant 0 : index
    %266 = vector.load %arg2[%c1, %c0_29, %c0_30] : memref<3x8x8xf32, #tpu.memory_space<vmem>>, vector<1x8x8xf32>
    %267 = vector.shape_cast %266 : vector<1x8x8xf32> to vector<8x8xf32>
    %cst_31 = arith.constant dense<0.000000e+00> : vector<8x256xf32>
    %268 = tpu.matmul %267, %265, %cst_31 {dimension_numbers = #tpu.dot_dimension_numbers<[1], [0], [0], [1], [0, 0, 1, 1], [], []>, precision = #tpu.contract_precision<fp32>} : vector<8x8xf32>, vector<8x256xf32>, vector<8x256xf32> -> vector<8x256xf32>
    %269 = vector.extract_strided_slice %1 {offsets = [0, 5], sizes = [8, 1], strides = [1, 1]} : vector<8x7xf32> to vector<8x1xf32>
    %270 = vector.broadcast %269 : vector<8x1xf32> to vector<8x256xf32>
    %271 = arith.addf %268, %270 : vector<8x256xf32>
    %272 = arith.mulf %49, %271 : vector<8x256xf32>
    %c2 = arith.constant 2 : index
    %c0_32 = arith.constant 0 : index
    %c0_33 = arith.constant 0 : index
    %273 = vector.load %arg2[%c2, %c0_32, %c0_33] : memref<3x8x8xf32, #tpu.memory_space<vmem>>, vector<1x8x8xf32>
    %274 = vector.shape_cast %273 : vector<1x8x8xf32> to vector<8x8xf32>
    %cst_34 = arith.constant dense<0.000000e+00> : vector<8x256xf32>
    %275 = tpu.matmul %274, %272, %cst_34 {dimension_numbers = #tpu.dot_dimension_numbers<[1], [0], [0], [1], [0, 0, 1, 1], [], []>, precision = #tpu.contract_precision<fp32>} : vector<8x8xf32>, vector<8x256xf32>, vector<8x256xf32> -> vector<8x256xf32>
    %276 = vector.extract_strided_slice %1 {offsets = [0, 6], sizes = [8, 1], strides = [1, 1]} : vector<8x7xf32> to vector<8x1xf32>
    %277 = vector.broadcast %276 : vector<8x1xf32> to vector<8x256xf32>
    %278 = arith.addf %275, %277 : vector<8x256xf32>
    %c0_35 = arith.constant 0 : index
    %c0_36 = arith.constant 0 : index
    %279 = vector.load %arg6[%c0_35, %c0_36] : memref<8x256xf32, #tpu.memory_space<vmem>>, vector<8x256xf32>
    tpu.vector_store %arg6[%c0_35, %c0_36], %278 {strides = array<i32>} : memref<8x256xf32, #tpu.memory_space<vmem>>, vector<8x256xf32>,
    return
  }
  func.func @transform_0(%arg0: i32) -> (i32, i32) {
    %c0_i32 = arith.constant 0 : i32
    %c0_i32_0 = arith.constant 0 : i32
    return %arg0, %c0_i32 : i32, i32
  }
  func.func @transform_1(%arg0: i32) -> (i32, i32, i32) {
    %c0_i32 = arith.constant 0 : i32
    %c0_i32_0 = arith.constant 0 : i32
    %c0_i32_1 = arith.constant 0 : i32
    %c0_i32_2 = arith.constant 0 : i32
    return %c0_i32, %c0_i32_0, %c0_i32_1 : i32, i32, i32
  }
  func.func @transform_2(%arg0: i32) -> (i32, i32) {
    %c0_i32 = arith.constant 0 : i32
    %c0_i32_0 = arith.constant 0 : i32
    %c0_i32_1 = arith.constant 0 : i32
    return %c0_i32, %c0_i32_0 : i32, i32
  }
  func.func @transform_3(%arg0: i32) -> (i32, i32) {
    %c0_i32 = arith.constant 0 : i32
    %c0_i32_0 = arith.constant 0 : i32
    %c0_i32_1 = arith.constant 0 : i32
    return %c0_i32, %c0_i32_0 : i32, i32
  }
  func.func @transform_4(%arg0: i32) -> (i32, i32) {
    %c0_i32 = arith.constant 0 : i32
    %c0_i32_0 = arith.constant 0 : i32
    %c0_i32_1 = arith.constant 0 : i32
    return %c0_i32, %c0_i32_0 : i32, i32
  }
  func.func @transform_5(%arg0: i32) -> (i32, i32) {
    %c0_i32 = arith.constant 0 : i32
    %c0_i32_0 = arith.constant 0 : i32
    return %arg0, %c0_i32 : i32, i32
  }
}

</mosaic_0001>

<llo_original>
// kernel: lskat_apply.1
$region0: #{lskat_apply.1}
  #allocation0 [shape = 'u32[]', space=smem, size = 0x4, offset = 0x4, fixed_abs, tag = 'smem constant byte address 0x4 - core index']
  #allocation1 [shape = 'u32[72,128]{1,0:T(1,128)}', space=vmem, size = 0x9000, scoped, tag = 'internal scratch']
  %s0 = inlined_call_operand.vmem [shape: f32[8,256], index: 0, kind: input, shape index: {}]
  %s1 = inlined_call_operand.vmem [shape: f32[3,8,8], index: 1, kind: input, shape index: {}]
  %s2 = inlined_call_operand.vmem [shape: f32[8,28], index: 2, kind: input, shape index: {}]
  %s3 = inlined_call_operand.vmem [shape: f32[8,7], index: 3, kind: input, shape index: {}]
  %s4 = inlined_call_operand.vmem [shape: f32[20,256], index: 4, kind: input, shape index: {}]
  %s5 = inlined_call_operand.vmem [shape: f32[8,256], index: 5, kind: output, shape index: {}]
  %s6 = sld [smem:[#allocation0]]
  $region30: #{lskat_apply.1} parent=0
    _
  %s8 = ssub.s32 1, %s6
  %s9 = scalar_select 0, %s8, %s6
  // Predicated region
  $region2: #{lskat_apply.1} parent=0 // pred_check
    _
  $region3: #{lskat_apply.1} parent=0 // pred_check_branch
    %11 = sbr.rel (0) target = $region5
  $region4: #{lskat_apply.1} parent=0 // pred_region
    _
  $region5: #{lskat_apply.1} parent=0 // pred_fallthru
    _
  // Predicated region
  $region6: #{lskat_apply.1} parent=0 // pred_check
    _
  $region7: #{lskat_apply.1} parent=0 // pred_check_branch
    %13 = sbr.rel (0) target = $region9
  $region8: #{lskat_apply.1} parent=0 // pred_region
    _
  $region9: #{lskat_apply.1} parent=0 // pred_fallthru
    _
  // Predicated region
  $region10: #{lskat_apply.1} parent=0 // pred_check
    _
  $region11: #{lskat_apply.1} parent=0 // pred_check_branch
    %15 = sbr.rel (0) target = $region13
  $region12: #{lskat_apply.1} parent=0 // pred_region
    _
  $region13: #{lskat_apply.1} parent=0 // pred_fallthru
    _
  // Predicated region
  $region14: #{lskat_apply.1} parent=0 // pred_check
    _
  $region15: #{lskat_apply.1} parent=0 // pred_check_branch
    %17 = sbr.rel (0) target = $region17
  $region16: #{lskat_apply.1} parent=0 // pred_region
    _
  $region17: #{lskat_apply.1} parent=0 // pred_fallthru
    _
  // Predicated region
  $region18: #{lskat_apply.1} parent=0 // pred_check
    _
  $region19: #{lskat_apply.1} parent=0 // pred_check_branch
    %19 = sbr.rel (0) target = $region21
  $region20: #{lskat_apply.1} parent=0 // pred_region
    _
  $region21: #{lskat_apply.1} parent=0 // pred_fallthru
    _
  %v20 = vld [vmem:[%s2] sm:$0xff]
  %v21 = vld [vmem:[%s3] sm:$0xff]
  %v22 = vld [vmem:[%s4] sm:$0xff]
  %v23 = vld [vmem:[%s4 + $0x8] sm:$0xff]
  %v24 = vld [vmem:[%s4 + $0x10] sm:$0xff]
  %v25 = vld [vmem:[%s4 + $0x18] sm:$0xff]
  %v26 = vld [vmem:[%s4 + $0x20] sm:$0xf]
  %v27 = vld [vmem:[%s4 + $0x28] sm:$0xf]
  %v28 = vld [vmem:[%s0] sm:$0xff]
  %v29 = vld [vmem:[%s0 + $0x8] sm:$0xff]
  %v30 = vld [vmem:[%s1] sm:$0xff]
  %32 = vset.pattern.permute.xlu0 0
  %33 = vperm.xlu0 %32, %v21
  %v34 = vpop.permute.xlu0 %33
  %vm36 = vcmask 64512
  %v38 = vsel %vm36, %v30, 0
  %40 = vmatpush.msra.mxu0 0.0
  %41 = vmatpush.msra.mxu0 0.0
  %42 = vmatpush.msra.mxu0 0.0
  %43 = vmatpush.msra.mxu0 0.0
  %44 = vmatpush.msra.mxu0 0.0
  %45 = vmatpush.msra.mxu0 0.0
  %46 = vmatpush.msra.mxu0 0.0
  %47 = vmatpush.msra.mxu0 0.0
  %48 = vmatpush.msra.mxu0 0.0
  %49 = vmatpush.msra.mxu0 0.0
  %50 = vmatpush.msra.mxu0 0.0
  %51 = vmatpush.msra.mxu0 0.0
  %52 = vmatpush.msra.mxu0 0.0
  %53 = vmatpush.msra.mxu0 0.0
  %54 = vmatpush.msra.mxu0 0.0
  %v55 = vand.u32 %v28, 4294901760
  %56 = vmatpush.msra.mxu0 %v55
  %v57 = vand.u32 %v38, 4294901760
  %v58 = vsub.f32 %v38, %v57
  %v59 = vand.u32 %v58, 4294901760
  %v60 = vsub.f32 %v58, %v59
  %v61 = vand.u32 %v60, 4294901760
  %62 = vmatmul.f32.gmra.mxu0 %v61
  %v63 = vpop.f32.mrf.mxu0
  %v64 = vadd.f32 %v34, %v63
  %65 = vdwg.mxu0
  %66 = vmatpush.msra.mxu0 0.0
  %67 = vmatpush.msra.mxu0 0.0
  %68 = vmatpush.msra.mxu0 0.0
  %69 = vmatpush.msra.mxu0 0.0
  %70 = vmatpush.msra.mxu0 0.0
  %71 = vmatpush.msra.mxu0 0.0
  %72 = vmatpush.msra.mxu0 0.0
  %73 = vmatpush.msra.mxu0 0.0
  %74 = vmatpush.msra.mxu0 0.0
  %75 = vmatpush.msra.mxu0 0.0
  %76 = vmatpush.msra.mxu0 0.0
  %77 = vmatpush.msra.mxu0 0.0
  %78 = vmatpush.msra.mxu0 0.0
  %79 = vmatpush.msra.mxu0 0.0
  %80 = vmatpush.msra.mxu0 0.0
  %v81 = vand.u32 %v28, 4294901760
  %v82 = vsub.f32 %v28, %v81
  %v83 = vand.u32 %v82, 4294901760
  %v84 = vsub.f32 %v82, %v83
  %v85 = vand.u32 %v84, 4294901760
  %86 = vmatpush.msra.mxu0 %v85
  %v87 = vand.u32 %v38, 4294901760
  %88 = vmatmul.f32.gmra.mxu0 %v87
  %v89 = vpop.f32.mrf.mxu0
  %v90 = vadd.f32 %v64, %v89
  %91 = vdwg.mxu0
  %92 = vmatpush.msra.mxu0 0.0
  %93 = vmatpush.msra.mxu0 0.0
  %94 = vmatpush.msra.mxu0 0.0
  %95 = vmatpush.msra.mxu0 0.0
  %96 = vmatpush.msra.mxu0 0.0
  %97 = vmatpush.msra.mxu0 0.0
  %98 = vmatpush.msra.mxu0 0.0
  %99 = vmatpush.msra.mxu0 0.0
  %100 = vmatpush.msra.mxu0 0.0
  %101 = vmatpush.msra.mxu0 0.0
  %102 = vmatpush.msra.mxu0 0.0
  %103 = vmatpush.msra.mxu0 0.0
  %104 = vmatpush.msra.mxu0 0.0
  %105 = vmatpush.msra.mxu0 0.0
  %106 = vmatpush.msra.mxu0 0.0
  %v107 = vand.u32 %v28, 4294901760
  %v108 = vsub.f32 %v28, %v107
  %109 = vmatpush.msra.mxu0 %v108
  %v110 = vand.u32 %v38, 4294901760
  %v111 = vsub.f32 %v38, %v110
  %112 = vmatmul.f32.gmra.mxu0 %v111
  %v113 = vpop.f32.mrf.mxu0
  %v114 = vadd.f32 %v90, %v113
  %115 = vdwg.mxu0
  %116 = vmatpush.msra.mxu0 0.0
  %117 = vmatpush.msra.mxu0 0.0
  %118 = vmatpush.msra.mxu0 0.0
  %119 = vmatpush.msra.mxu0 0.0
  %120 = vmatpush.msra.mxu0 0.0
  %121 = vmatpush.msra.mxu0 0.0
  %122 = vmatpush.msra.mxu0 0.0
  %123 = vmatpush.msra.mxu0 0.0
  %124 = vmatpush.msra.mxu0 0.0
  %125 = vmatpush.msra.mxu0 0.0
  %126 = vmatpush.msra.mxu0 0.0
  %127 = vmatpush.msra.mxu0 0.0
  %128 = vmatpush.msra.mxu0 0.0
  %129 = vmatpush.msra.mxu0 0.0
  %130 = vmatpush.msra.mxu0 0.0
  %v131 = vand.u32 %v28, 4294901760
  %132 = vmatpush.msra.mxu0 %v131
  %v133 = vand.u32 %v38, 4294901760
  %v134 = vsub.f32 %v38, %v133
  %v135 = vand.u32 %v134, 4294901760
  %136 = vmatmul.f32.gmra.mxu0 %v135
  %v137 = vpop.f32.mrf.mxu0
  %v138 = vadd.f32 %v114, %v137
  %139 = vdwg.mxu0
  %140 = vmatpush.msra.mxu0 0.0
  %141 = vmatpush.msra.mxu0 0.0
  %142 = vmatpush.msra.mxu0 0.0
  %143 = vmatpush.msra.mxu0 0.0
  %144 = vmatpush.msra.mxu0 0.0
  %145 = vmatpush.msra.mxu0 0.0
  %146 = vmatpush.msra.mxu0 0.0
  %147 = vmatpush.msra.mxu0 0.0
  %148 = vmatpush.msra.mxu0 0.0
  %149 = vmatpush.msra.mxu0 0.0
  %150 = vmatpush.msra.mxu0 0.0
  %151 = vmatpush.msra.mxu0 0.0
  %152 = vmatpush.msra.mxu0 0.0
  %153 = vmatpush.msra.mxu0 0.0
  %154 = vmatpush.msra.mxu0 0.0
  %v155 = vand.u32 %v28, 4294901760
  %v156 = vsub.f32 %v28, %v155
  %v157 = vand.u32 %v156, 4294901760
  %158 = vmatpush.msra.mxu0 %v157
  %v159 = vand.u32 %v38, 4294901760
  %160 = vmatmul.f32.gmra.mxu0 %v159
  %v161 = vpop.f32.mrf.mxu0
  %v162 = vadd.f32 %v138, %v161
  %163 = vdwg.mxu0
  %164 = vmatpush.msra.mxu0 0.0
  %165 = vmatpush.msra.mxu0 0.0
  %166 = vmatpush.msra.mxu0 0.0
  %167 = vmatpush.msra.mxu0 0.0
  %168 = vmatpush.msra.mxu0 0.0
  %169 = vmatpush.msra.mxu0 0.0
  %170 = vmatpush.msra.mxu0 0.0
  %171 = vmatpush.msra.mxu0 0.0
  %172 = vmatpush.msra.mxu0 0.0
  %173 = vmatpush.msra.mxu0 0.0
  %174 = vmatpush.msra.mxu0 0.0
  %175 = vmatpush.msra.mxu0 0.0
  %176 = vmatpush.msra.mxu0 0.0
  %177 = vmatpush.msra.mxu0 0.0
  %178 = vmatpush.msra.mxu0 0.0
  %v179 = vand.u32 %v28, 4294901760
  %180 = vmatpush.msra.mxu0 %v179
  %v181 = vand.u32 %v38, 4294901760
  %182 = vmatmul.f32.gmra.mxu0 %v181
  %v183 = vpop.f32.mrf.mxu0
  %v184 = vadd.f32 %v162, %v183
  %185 = vdwg.mxu0
  %186 = vmatpush.msra.mxu0 0.0
  %187 = vmatpush.msra.mxu0 0.0
  %188 = vmatpush.msra.mxu0 0.0
  %189 = vmatpush.msra.mxu0 0.0
  %190 = vmatpush.msra.mxu0 0.0
  %191 = vmatpush.msra.mxu0 0.0
  %192 = vmatpush.msra.mxu0 0.0
  %193 = vmatpush.msra.mxu0 0.0
  %194 = vmatpush.msra.mxu0 0.0
  %195 = vmatpush.msra.mxu0 0.0
  %196 = vmatpush.msra.mxu0 0.0
  %197 = vmatpush.msra.mxu0 0.0
  %198 = vmatpush.msra.mxu0 0.0
  %199 = vmatpush.msra.mxu0 0.0
  %200 = vmatpush.msra.mxu0 0.0
  %v201 = vand.u32 %v29, 4294901760
  %202 = vmatpush.msra.mxu0 %v201
  %v203 = vand.u32 %v38, 4294901760
  %v204 = vsub.f32 %v38, %v203
  %v205 = vand.u32 %v204, 4294901760
  %v206 = vsub.f32 %v204, %v205
  %v207 = vand.u32 %v206, 4294901760
  %208 = vmatmul.f32.gmra.mxu0 %v207
  %v209 = vpop.f32.mrf.mxu0
  %v210 = vadd.f32 %v34, %v209
  %211 = vdwg.mxu0
  %212 = vmatpush.msra.mxu0 0.0
  %213 = vmatpush.msra.mxu0 0.0
  %214 = vmatpush.msra.mxu0 0.0
  %215 = vmatpush.msra.mxu0 0.0
  %216 = vmatpush.msra.mxu0 0.0
  %217 = vmatpush.msra.mxu0 0.0
  %218 = vmatpush.msra.mxu0 0.0
  %219 = vmatpush.msra.mxu0 0.0
  %220 = vmatpush.msra.mxu0 0.0
  %221 = vmatpush.msra.mxu0 0.0
  %222 = vmatpush.msra.mxu0 0.0
  %223 = vmatpush.msra.mxu0 0.0
  %224 = vmatpush.msra.mxu0 0.0
  %225 = vmatpush.msra.mxu0 0.0
  %226 = vmatpush.msra.mxu0 0.0
  %v227 = vand.u32 %v29, 4294901760
  %v228 = vsub.f32 %v29, %v227
  %v229 = vand.u32 %v228, 4294901760
  %v230 = vsub.f32 %v228, %v229
  %v231 = vand.u32 %v230, 4294901760
  %232 = vmatpush.msra.mxu0 %v231
  %v233 = vand.u32 %v38, 4294901760
  %234 = vmatmul.f32.gmra.mxu0 %v233
  %v235 = vpop.f32.mrf.mxu0
  %v236 = vadd.f32 %v210, %v235
  %237 = vdwg.mxu0
  %238 = vmatpush.msra.mxu0 0.0
  %239 = vmatpush.msra.mxu0 0.0
  %240 = vmatpush.msra.mxu0 0.0
  %241 = vmatpush.msra.mxu0 0.0
  %242 = vmatpush.msra.mxu0 0.0
  %243 = vmatpush.msra.mxu0 0.0
  %244 = vmatpush.msra.mxu0 0.0
  %245 = vmatpush.msra.mxu0 0.0
  %246 = vmatpush.msra.mxu0 0.0
  %247 = vmatpush.msra.mxu0 0.0
  %248 = vmatpush.msra.mxu0 0.0
  %249 = vmatpush.msra.mxu0 0.0
  %250 = vmatpush.msra.mxu0 0.0
  %251 = vmatpush.msra.mxu0 0.0
  %252 = vmatpush.msra.mxu0 0.0
  %v253 = vand.u32 %v29, 4294901760
  %v254 = vsub.f32 %v29, %v253
  %255 = vmatpush.msra.mxu0 %v254
  %v256 = vand.u32 %v38, 4294901760
  %v257 = vsub.f32 %v38, %v256
  %258 = vmatmul.f32.gmra.mxu0 %v257
  %v259 = vpop.f32.mrf.mxu0
  %v260 = vadd.f32 %v236, %v259
  %261 = vdwg.mxu0
  %262 = vmatpush.msra.mxu0 0.0
  %263 = vmatpush.msra.mxu0 0.0
  %264 = vmatpush.msra.mxu0 0.0
  %265 = vmatpush.msra.mxu0 0.0
  %266 = vmatpush.msra.mxu0 0.0
  %267 = vmatpush.msra.mxu0 0.0
  %268 = vmatpush.msra.mxu0 0.0
  %269 = vmatpush.msra.mxu0 0.0
  %270 = vmatpush.msra.mxu0 0.0
  %271 = vmatpush.msra.mxu0 0.0
  %272 = vmatpush.msra.mxu0 0.0
  %273 = vmatpush.msra.mxu0 0.0
  %274 = vmatpush.msra.mxu0 0.0
  %275 = vmatpush.msra.mxu0 0.0
  %276 = vmatpush.msra.mxu0 0.0
  %v277 = vand.u32 %v29, 4294901760
  %278 = vmatpush.msra.mxu0 %v277
  %v279 = vand.u32 %v38, 4294901760
  %v280 = vsub.f32 %v38, %v279
  %v281 = vand.u32 %v280, 4294901760
  %282 = vmatmul.f32.gmra.mxu0 %v281
  %v283 = vpop.f32.mrf.mxu0
  %v284 = vadd.f32 %v260, %v283
  %285 = vdwg.mxu0
  %286 = vmatpush.msra.mxu0 0.0
  %287 = vmatpush.msra.mxu0 0.0
  %288 = vmatpush.msra.mxu0 0.0
  %289 = vmatpush.msra.mxu0 0.0
  %290 = vmatpush.msra.mxu0 0.0
  %291 = vmatpush.msra.mxu0 0.0
  %292 = vmatpush.msra.mxu0 0.0
  %293 = vmatpush.msra.mxu0 0.0
  %294 = vmatpush.msra.mxu0 0.0
  %295 = vmatpush.msra.mxu0 0.0
  %296 = vmatpush.msra.mxu0 0.0
  %297 = vmatpush.msra.mxu0 0.0
  %298 = vmatpush.msra.mxu0 0.0
  %299 = vmatpush.msra.mxu0 0.0
  %300 = vmatpush.msra.mxu0 0.0
  %v301 = vand.u32 %v29, 4294901760
  %v302 = vsub.f32 %v29, %v301
  %v303 = vand.u32 %v302, 4294901760
  %304 = vmatpush.msra.mxu0 %v303
  %v305 = vand.u32 %v38, 4294901760
  %306 = vmatmul.f32.gmra.mxu0 %v305
  %v307 = vpop.f32.mrf.mxu0
  %v308 = vadd.f32 %v284, %v307
  %309 = vdwg.mxu0
  %310 = vmatpush.msra.mxu0 0.0
  %311 = vmatpush.msra.mxu0 0.0
  %312 = vmatpush.msra.mxu0 0.0
  %313 = vmatpush.msra.mxu0 0.0
  %314 = vmatpush.msra.mxu0 0.0
  %315 = vmatpush.msra.mxu0 0.0
  %316 = vmatpush.msra.mxu0 0.0
  %317 = vmatpush.msra.mxu0 0.0
  %318 = vmatpush.msra.mxu0 0.0
  %319 = vmatpush.msra.mxu0 0.0
  %320 = vmatpush.msra.mxu0 0.0
  %321 = vmatpush.msra.mxu0 0.0
  %322 = vmatpush.msra.mxu0 0.0
  %323 = vmatpush.msra.mxu0 0.0
  %324 = vmatpush.msra.mxu0 0.0
  %v325 = vand.u32 %v29, 4294901760
  %326 = vmatpush.msra.mxu0 %v325
  %v327 = vand.u32 %v38, 4294901760
  %328 = vmatmul.f32.gmra.mxu0 %v327
  %v329 = vpop.f32.mrf.mxu0
  %v330 = vadd.f32 %v308, %v329
  %331 = vdwg.mxu0
  %v332 = vmul.f32 %v184, 0.5
  %v333 = vmul.f32 %v330, 0.5
  %v334 = vmul.f32 %v184, 0.70710677
  %v335 = vmul.f32 %v330, 0.70710677
  %vm336 = vcmp.ge.f32.partialorder %v334, 0.0
  %vm337 = vcmp.ge.f32.partialorder %v335, 0.0
  %v338 = vsel %vm336, 1.0, -1.0
  %v339 = vsel %vm337, 1.0, -1.0
  %v340 = vand.u32 2147483647, %v334
  %v341 = vand.u32 2147483647, %v335
  %v342 = vmul.f32 %v340, 0.3275911
  %v343 = vmul.f32 %v341, 0.3275911
  %v344 = vadd.f32 %v342, 1.0
  %v345 = vadd.f32 %v343, 1.0
  %v346 = vrcp.pop %v344
  %v347 = vmul.f32 %v344, %v346
  %v348 = vsub.f32 1.0, %v347
  %v349 = vmul.f32 %v346, %v348
  %v350 = vadd.f32 %v346, %v349
  %vm351 = vweird.f32 %v344
  %vm352 = vweird.f32 %v346
  %vm353 = vmor %vm351, %vm352
  %v354 = vsel %vm353, %v346, %v350
  %v355 = vand.u32 2147483647, %v344
  %vm356 = vcmp.eq.f32.partialorder %v355, 8.507059e+37
  %v357 = vand.u32 %v344, 2147483648
  %v358 = vor.u32 1.1754944e-38, %v357
  %v359 = vsel %vm356, %v358, %v354
  %v360 = vrcp.pop %v345
  %v361 = vmul.f32 %v345, %v360
  %v362 = vsub.f32 1.0, %v361
  %v363 = vmul.f32 %v360, %v362
  %v364 = vadd.f32 %v360, %v363
  %vm365 = vweird.f32 %v345
  %vm366 = vweird.f32 %v360
  %vm367 = vmor %vm365, %vm366
  %v368 = vsel %vm367, %v360, %v364
  %v369 = vand.u32 2147483647, %v345
  %vm370 = vcmp.eq.f32.partialorder %v369, 8.507059e+37
  %v371 = vand.u32 %v345, 2147483648
  %v372 = vor.u32 1.1754944e-38, %v371
  %v373 = vsel %vm370, %v372, %v368
  %v374 = vmul.f32 %v359, 1.0614054
  %v375 = vmul.f32 %v373, 1.0614054
  %v376 = vsub.f32 %v374, 1.4531521
  %v377 = vsub.f32 %v375, 1.4531521
  %v378 = vmul.f32 %v376, %v359
  %v379 = vmul.f32 %v377, %v373
  %v380 = vadd.f32 %v378, 1.4214138
  %v381 = vadd.f32 %v379, 1.4214138
  %v382 = vmul.f32 %v380, %v359
  %v383 = vmul.f32 %v381, %v373
  %v384 = vsub.f32 %v382, 0.28449672
  %v385 = vsub.f32 %v383, 0.28449672
  %v386 = vmul.f32 %v384, %v359
  %v387 = vmul.f32 %v385, %v373
  %v388 = vadd.f32 %v386, 0.2548296
  %v389 = vadd.f32 %v387, 0.2548296
  %v390 = vmul.f32 %v388, %v359
  %v391 = vmul.f32 %v389, %v373
  %v392 = vsub.f32 0.0, %v340
  %v393 = vsub.f32 0.0, %v341
  %v394 = vmul.f32 %v392, %v340
  %v395 = vmul.f32 %v393, %v341
  %v396 = vmul.f32 %v394, 1.442695
  %v397 = vpow.pop %v396
  %v398 = vmul.f32 %v395, 1.442695
  %v399 = vpow.pop %v398
  %v400 = vmul.f32 %v390, %v397
  %v401 = vmul.f32 %v391, %v399
  %v402 = vsub.f32 1.0, %v400
  %v403 = vsub.f32 1.0, %v401
  %v404 = vmul.f32 %v338, %v402
  %v405 = vmul.f32 %v339, %v403
  %v406 = vadd.f32 %v404, 1.0
  %v407 = vadd.f32 %v405, 1.0
  %v408 = vmul.f32 %v332, %v406
  %v409 = vmul.f32 %v333, %v407
  %411 = vset.pattern.permute.xlu0 3
  %412 = vperm.xlu0 %411, %v20
  %v413 = vpop.permute.xlu0 %412
  %v415 = vmul.f32 %v408, %v413
  %v416 = vmul.f32 %v409, %v413
  %417 = vset.pattern.permute.xlu0 1
  %418 = vperm.xlu0 %417, %v21
  %v419 = vpop.permute.xlu0 %418
  %v421 = vadd.f32 %v415, %v419
  %v422 = vadd.f32 %v416, %v419
  %423 = vrot.lane.b32.xlu0 %v408, 3
  %v424 = vpop.permute.xlu0 %423
  %425 = vrot.lane.b32.xlu0 %v409, 3
  %v426 = vpop.permute.xlu0 %425
  %v427 = vlaneseq
  %v428 = vand.u32 %v427, 127
  %vm429 = vcmp.lt.s32.totalorder %v428, 3
  %v430 = vsel %vm429, %v424, %v426
  %v431 = vsel %vm429, %v426, %v424
  %v432 = vperm.slane %v22, 0
  %v433 = vperm.slane %v23, 0
  %v434 = vmul.f32 %v431, %v432
  %v435 = vmul.f32 %v430, %v433
  %436 = vset.pattern.permute.xlu0 0
  %437 = vperm.xlu0 %436, %v20
  %v438 = vpop.permute.xlu0 %437
  %v440 = vmul.f32 %v434, %v438
  %v441 = vmul.f32 %v435, %v438
  %v442 = vadd.f32 %v421, %v440
  %v443 = vadd.f32 %v422, %v441
  %444 = vrot.lane.b32.xlu0 %v408, 2
  %v445 = vpop.permute.xlu0 %444
  %446 = vrot.lane.b32.xlu0 %v409, 2
  %v447 = vpop.permute.xlu0 %446
  %vm448 = vcmp.lt.s32.totalorder %v428, 2
  %v449 = vsel %vm448, %v445, %v447
  %v450 = vsel %vm448, %v447, %v445
  %v451 = vperm.slane %v22, 1
  %v452 = vperm.slane %v23, 1
  %v453 = vmul.f32 %v450, %v451
  %v454 = vmul.f32 %v449, %v452
  %455 = vset.pattern.permute.xlu0 1
  %456 = vperm.xlu0 %455, %v20
  %v457 = vpop.permute.xlu0 %456
  %v459 = vmul.f32 %v453, %v457
  %v460 = vmul.f32 %v454, %v457
  %v461 = vadd.f32 %v442, %v459
  %v462 = vadd.f32 %v443, %v460
  %463 = vrot.lane.b32.xlu0 %v408, 1
  %v464 = vpop.permute.xlu0 %463
  %465 = vrot.lane.b32.xlu0 %v409, 1
  %v466 = vpop.permute.xlu0 %465
  %vm467 = vcmp.lt.s32.totalorder %v428, 1
  %v468 = vsel %vm467, %v464, %v466
  %v469 = vsel %vm467, %v466, %v464
  %v470 = vperm.slane %v22, 2
  %v471 = vperm.slane %v23, 2
  %v472 = vmul.f32 %v469, %v470
  %v473 = vmul.f32 %v468, %v471
  %474 = vset.pattern.permute.xlu0 2
  %475 = vperm.xlu0 %474, %v20
  %v476 = vpop.permute.xlu0 %475
  %v478 = vmul.f32 %v472, %v476
  %v479 = vmul.f32 %v473, %v476
  %v480 = vadd.f32 %v461, %v478
  %v481 = vadd.f32 %v462, %v479
  %482 = vrot.lane.b32.xlu0 %v408, 127
  %v483 = vpop.permute.xlu0 %482
  %484 = vrot.lane.b32.xlu0 %v409, 127
  %v485 = vpop.permute.xlu0 %484
  %vm486 = vcmp.lt.s32.totalorder %v428, 127
  %v487 = vsel %vm486, %v483, %v485
  %v488 = vsel %vm486, %v485, %v483
  %v489 = vperm.slane %v22, 3
  %v490 = vperm.slane %v23, 3
  %v491 = vmul.f32 %v487, %v489
  %v492 = vmul.f32 %v488, %v490
  %493 = vset.pattern.permute.xlu0 4
  %494 = vperm.xlu0 %493, %v20
  %v495 = vpop.permute.xlu0 %494
  %v497 = vmul.f32 %v491, %v495
  %v498 = vmul.f32 %v492, %v495
  %v499 = vadd.f32 %v480, %v497
  %v500 = vadd.f32 %v481, %v498
  %501 = vrot.lane.b32.xlu0 %v408, 126
  %v502 = vpop.permute.xlu0 %501
  %503 = vrot.lane.b32.xlu0 %v409, 126
  %v504 = vpop.permute.xlu0 %503
  %vm505 = vcmp.lt.s32.totalorder %v428, 126
  %v506 = vsel %vm505, %v502, %v504
  %v507 = vsel %vm505, %v504, %v502
  %v508 = vperm.slane %v22, 4
  %v509 = vperm.slane %v23, 4
  %v510 = vmul.f32 %v506, %v508
  %v511 = vmul.f32 %v507, %v509
  %512 = vset.pattern.permute.xlu0 5
  %513 = vperm.xlu0 %512, %v20
  %v514 = vpop.permute.xlu0 %513
  %v516 = vmul.f32 %v510, %v514
  %v517 = vmul.f32 %v511, %v514
  %v518 = vadd.f32 %v499, %v516
  %v519 = vadd.f32 %v500, %v517
  %520 = vrot.lane.b32.xlu0 %v408, 125
  %v521 = vpop.permute.xlu0 %520
  %522 = vrot.lane.b32.xlu0 %v409, 125
  %v523 = vpop.permute.xlu0 %522
  %vm524 = vcmp.lt.s32.totalorder %v428, 125
  %v525 = vsel %vm524, %v521, %v523
  %v526 = vsel %vm524, %v523, %v521
  %v527 = vperm.slane %v22, 5
  %v528 = vperm.slane %v23, 5
  %v529 = vmul.f32 %v525, %v527
  %v530 = vmul.f32 %v526, %v528
  %531 = vset.pattern.permute.xlu0 6
  %532 = vperm.xlu0 %531, %v20
  %v533 = vpop.permute.xlu0 %532
  %v535 = vmul.f32 %v529, %v533
  %v536 = vmul.f32 %v530, %v533
  %v537 = vadd.f32 %v518, %v535
  %v538 = vadd.f32 %v519, %v536
  %539 = vset.pattern.permute.xlu0 10
  %540 = vperm.xlu0 %539, %v20
  %v541 = vpop.permute.xlu0 %540
  %v543 = vmul.f32 %v537, %v541
  %v544 = vmul.f32 %v538, %v541
  %545 = vset.pattern.permute.xlu0 2
  %546 = vperm.xlu0 %545, %v21
  %v547 = vpop.permute.xlu0 %546
  %v549 = vadd.f32 %v543, %v547
  %v550 = vadd.f32 %v544, %v547
  %551 = vrot.lane.b32.xlu0 %v537, 48
  %v552 = vpop.permute.xlu0 %551
  %553 = vrot.lane.b32.xlu0 %v538, 48
  %v554 = vpop.permute.xlu0 %553
  %vm555 = vcmp.lt.s32.totalorder %v428, 48
  %v556 = vsel %vm555, %v552, %v554
  %v557 = vsel %vm555, %v554, %v552
  %v558 = vperm.slane %v22, 6
  %v559 = vperm.slane %v23, 6
  %v560 = vmul.f32 %v557, %v558
  %v561 = vmul.f32 %v556, %v559
  %562 = vset.pattern.permute.xlu0 7
  %563 = vperm.xlu0 %562, %v20
  %v564 = vpop.permute.xlu0 %563
  %v566 = vmul.f32 %v560, %v564
  %v567 = vmul.f32 %v561, %v564
  %v568 = vadd.f32 %v549, %v566
  %v569 = vadd.f32 %v550, %v567
  %570 = vrot.lane.b32.xlu0 %v537, 32
  %v571 = vpop.permute.xlu0 %570
  %572 = vrot.lane.b32.xlu0 %v538, 32
  %v573 = vpop.permute.xlu0 %572
  %vm574 = vcmp.lt.s32.totalorder %v428, 32
  %v575 = vsel %vm574, %v571, %v573
  %v576 = vsel %vm574, %v573, %v571
  %v577 = vperm.slane %v22, 7
  %v578 = vperm.slane %v23, 7
  %v579 = vmul.f32 %v576, %v577
  %v580 = vmul.f32 %v575, %v578
  %581 = vset.pattern.permute.xlu0 8
  %582 = vperm.xlu0 %581, %v20
  %v583 = vpop.permute.xlu0 %582
  %v585 = vmul.f32 %v579, %v583
  %v586 = vmul.f32 %v580, %v583
  %v587 = vadd.f32 %v568, %v585
  %v588 = vadd.f32 %v569, %v586
  %589 = vrot.lane.b32.xlu0 %v537, 16
  %v590 = vpop.permute.xlu0 %589
  %591 = vrot.lane.b32.xlu0 %v538, 16
  %v592 = vpop.permute.xlu0 %591
  %vm593 = vcmp.lt.s32.totalorder %v428, 16
  %v594 = vsel %vm593, %v590, %v592
  %v595 = vsel %vm593, %v592, %v590
  %v596 = vperm.slane %v24, 0
  %v597 = vperm.slane %v25, 0
  %v598 = vmul.f32 %v595, %v596
  %v599 = vmul.f32 %v594, %v597
  %600 = vset.pattern.permute.xlu0 9
  %601 = vperm.xlu0 %600, %v20
  %v602 = vpop.permute.xlu0 %601
  %v604 = vmul.f32 %v598, %v602
  %v605 = vmul.f32 %v599, %v602
  %v606 = vadd.f32 %v587, %v604
  %v607 = vadd.f32 %v588, %v605
  %608 = vrot.lane.b32.xlu0 %v537, 112
  %v609 = vpop.permute.xlu0 %608
  %610 = vrot.lane.b32.xlu0 %v538, 112
  %v611 = vpop.permute.xlu0 %610
  %vm612 = vcmp.lt.s32.totalorder %v428, 112
  %v613 = vsel %vm612, %v609, %v611
  %v614 = vsel %vm612, %v611, %v609
  %v615 = vperm.slane %v24, 1
  %v616 = vperm.slane %v25, 1
  %v617 = vmul.f32 %v613, %v615
  %v618 = vmul.f32 %v614, %v616
  %619 = vset.pattern.permute.xlu0 11
  %620 = vperm.xlu0 %619, %v20
  %v621 = vpop.permute.xlu0 %620
  %v623 = vmul.f32 %v617, %v621
  %v624 = vmul.f32 %v618, %v621
  %v625 = vadd.f32 %v606, %v623
  %v626 = vadd.f32 %v607, %v624
  %627 = vrot.lane.b32.xlu0 %v537, 96
  %v628 = vpop.permute.xlu0 %627
  %629 = vrot.lane.b32.xlu0 %v538, 96
  %v630 = vpop.permute.xlu0 %629
  %vm631 = vcmp.lt.s32.totalorder %v428, 96
  %v632 = vsel %vm631, %v628, %v630
  %v633 = vsel %vm631, %v630, %v628
  %v634 = vperm.slane %v24, 2
  %v635 = vperm.slane %v25, 2
  %v636 = vmul.f32 %v632, %v634
  %v637 = vmul.f32 %v633, %v635
  %638 = vset.pattern.permute.xlu0 12
  %639 = vperm.xlu0 %638, %v20
  %v640 = vpop.permute.xlu0 %639
  %v642 = vmul.f32 %v636, %v640
  %v643 = vmul.f32 %v637, %v640
  %v644 = vadd.f32 %v625, %v642
  %v645 = vadd.f32 %v626, %v643
  %646 = vrot.lane.b32.xlu0 %v537, 80
  %v647 = vpop.permute.xlu0 %646
  %648 = vrot.lane.b32.xlu0 %v538, 80
  %v649 = vpop.permute.xlu0 %648
  %vm650 = vcmp.lt.s32.totalorder %v428, 80
  %v651 = vsel %vm650, %v647, %v649
  %v652 = vsel %vm650, %v649, %v647
  %v653 = vperm.slane %v24, 3
  %v654 = vperm.slane %v25, 3
  %v655 = vmul.f32 %v651, %v653
  %v656 = vmul.f32 %v652, %v654
  %657 = vset.pattern.permute.xlu0 13
  %658 = vperm.xlu0 %657, %v20
  %v659 = vpop.permute.xlu0 %658
  %v661 = vmul.f32 %v655, %v659
  %v662 = vmul.f32 %v656, %v659
  %v663 = vadd.f32 %v644, %v661
  %v664 = vadd.f32 %v645, %v662
  %665 = vset.pattern.permute.xlu0 17
  %666 = vperm.xlu0 %665, %v20
  %v667 = vpop.permute.xlu0 %666
  %v669 = vmul.f32 %v663, %v667
  %v670 = vmul.f32 %v664, %v667
  %671 = vset.pattern.permute.xlu0 3
  %672 = vperm.xlu0 %671, %v21
  %v673 = vpop.permute.xlu0 %672
  %v675 = vadd.f32 %v669, %v673
  %v676 = vadd.f32 %v670, %v673
  %677 = vrot.lane.b32.xlu0 %v663, 9
  %v678 = vpop.permute.xlu0 %677
  %679 = vrot.lane.b32.xlu0 %v664, 9
  %v680 = vpop.permute.xlu0 %679
  %vm681 = vcmp.lt.s32.totalorder %v428, 9
  %v682 = vsel %vm681, %v678, %v680
  %v683 = vsel %vm681, %v680, %v678
  %v684 = vperm.slane %v24, 4
  %v685 = vperm.slane %v25, 4
  %v686 = vmul.f32 %v683, %v684
  %v687 = vmul.f32 %v682, %v685
  %688 = vset.pattern.permute.xlu0 14
  %689 = vperm.xlu0 %688, %v20
  %v690 = vpop.permute.xlu0 %689
  %v692 = vmul.f32 %v686, %v690
  %v693 = vmul.f32 %v687, %v690
  %v694 = vadd.f32 %v675, %v692
  %v695 = vadd.f32 %v676, %v693
  %696 = vrot.lane.b32.xlu0 %v663, 6
  %v697 = vpop.permute.xlu0 %696
  %698 = vrot.lane.b32.xlu0 %v664, 6
  %v699 = vpop.permute.xlu0 %698
  %vm700 = vcmp.lt.s32.totalorder %v428, 6
  %v701 = vsel %vm700, %v697, %v699
  %v702 = vsel %vm700, %v699, %v697
  %v703 = vperm.slane %v24, 5
  %v704 = vperm.slane %v25, 5
  %v705 = vmul.f32 %v702, %v703
  %v706 = vmul.f32 %v701, %v704
  %707 = vset.pattern.permute.xlu0 15
  %708 = vperm.xlu0 %707, %v20
  %v709 = vpop.permute.xlu0 %708
  %v711 = vmul.f32 %v705, %v709
  %v712 = vmul.f32 %v706, %v709
  %v713 = vadd.f32 %v694, %v711
  %v714 = vadd.f32 %v695, %v712
  %715 = vrot.lane.b32.xlu0 %v663, 3
  %v716 = vpop.permute.xlu0 %715
  %717 = vrot.lane.b32.xlu0 %v664, 3
  %v718 = vpop.permute.xlu0 %717
  %v719 = vsel %vm429, %v716, %v718
  %v720 = vsel %vm429, %v718, %v716
  %v721 = vmul.f32 %v720, %v432
  %v722 = vmul.f32 %v719, %v433
  %723 = vset.pattern.permute.xlu0 16
  %724 = vperm.xlu0 %723, %v20
  %v725 = vpop.permute.xlu0 %724
  %v727 = vmul.f32 %v721, %v725
  %v728 = vmul.f32 %v722, %v725
  %v729 = vadd.f32 %v713, %v727
  %v730 = vadd.f32 %v714, %v728
  %731 = vrot.lane.b32.xlu0 %v663, 125
  %v732 = vpop.permute.xlu0 %731
  %733 = vrot.lane.b32.xlu0 %v664, 125
  %v734 = vpop.permute.xlu0 %733
  %v735 = vsel %vm524, %v732, %v734
  %v736 = vsel %vm524, %v734, %v732
  %v737 = vmul.f32 %v735, %v527
  %v738 = vmul.f32 %v736, %v528
  %739 = vset.pattern.permute.xlu0 18
  %740 = vperm.xlu0 %739, %v20
  %v741 = vpop.permute.xlu0 %740
  %v743 = vmul.f32 %v737, %v741
  %v744 = vmul.f32 %v738, %v741
  %v745 = vadd.f32 %v729, %v743
  %v746 = vadd.f32 %v730, %v744
  %747 = vrot.lane.b32.xlu0 %v663, 122
  %v748 = vpop.permute.xlu0 %747
  %749 = vrot.lane.b32.xlu0 %v664, 122
  %v750 = vpop.permute.xlu0 %749
  %vm751 = vcmp.lt.s32.totalorder %v428, 122
  %v752 = vsel %vm751, %v748, %v750
  %v753 = vsel %vm751, %v750, %v748
  %v754 = vperm.slane %v24, 6
  %v755 = vperm.slane %v25, 6
  %v756 = vmul.f32 %v752, %v754
  %v757 = vmul.f32 %v753, %v755
  %758 = vset.pattern.permute.xlu0 19
  %759 = vperm.xlu0 %758, %v20
  %v760 = vpop.permute.xlu0 %759
  %v762 = vmul.f32 %v756, %v760
  %v763 = vmul.f32 %v757, %v760
  %v764 = vadd.f32 %v745, %v762
  %v765 = vadd.f32 %v746, %v763
  %766 = vrot.lane.b32.xlu0 %v663, 119
  %v767 = vpop.permute.xlu0 %766
  %768 = vrot.lane.b32.xlu0 %v664, 119
  %v769 = vpop.permute.xlu0 %768
  %vm770 = vcmp.lt.s32.totalorder %v428, 119
  %v771 = vsel %vm770, %v767, %v769
  %v772 = vsel %vm770, %v769, %v767
  %v773 = vperm.slane %v24, 7
  %v774 = vperm.slane %v25, 7
  %v775 = vmul.f32 %v771, %v773
  %v776 = vmul.f32 %v772, %v774
  %777 = vset.pattern.permute.xlu0 20
  %778 = vperm.xlu0 %777, %v20
  %v779 = vpop.permute.xlu0 %778
  %v781 = vmul.f32 %v775, %v779
  %v782 = vmul.f32 %v776, %v779
  %v783 = vadd.f32 %v764, %v781
  %v784 = vadd.f32 %v765, %v782
  %785 = vset.pattern.permute.xlu0 24
  %786 = vperm.xlu0 %785, %v20
  %v787 = vpop.permute.xlu0 %786
  %v789 = vmul.f32 %v783, %v787
  %v790 = vmul.f32 %v784, %v787
  %791 = vset.pattern.permute.xlu0 4
  %792 = vperm.xlu0 %791, %v21
  %v793 = vpop.permute.xlu0 %792
  %v795 = vadd.f32 %v789, %v793
  %v796 = vadd.f32 %v790, %v793
  %797 = vrot.lane.b32.xlu0 %v783, 16
  %v798 = vpop.permute.xlu0 %797
  %799 = vrot.lane.b32.xlu0 %v784, 16
  %v800 = vpop.permute.xlu0 %799
  %v801 = vsel %vm593, %v798, %v800
  %v802 = vsel %vm593, %v800, %v798
  %v803 = vperm.slane %v26, 0
  %v804 = vperm.slane %v27, 0
  %v805 = vmul.f32 %v801, %v803
  %v806 = vmul.f32 %v802, %v804
  %807 = vset.pattern.permute.xlu0 21
  %808 = vperm.xlu0 %807, %v20
  %v809 = vpop.permute.xlu0 %808
  %v811 = vmul.f32 %v805, %v809
  %v812 = vmul.f32 %v806, %v809
  %v813 = vadd.f32 %v795, %v811
  %v814 = vadd.f32 %v796, %v812
  %815 = vrot.lane.b32.xlu0 %v783, 96
  %v816 = vpop.permute.xlu0 %815
  %817 = vrot.lane.b32.xlu0 %v784, 96
  %v818 = vpop.permute.xlu0 %817
  %v819 = vsel %vm631, %v816, %v818
  %v820 = vsel %vm631, %v818, %v816
  %v821 = vperm.slane %v26, 1
  %v822 = vperm.slane %v27, 1
  %v823 = vmul.f32 %v820, %v821
  %v824 = vmul.f32 %v819, %v822
  %825 = vset.pattern.permute.xlu0 22
  %826 = vperm.xlu0 %825, %v20
  %v827 = vpop.permute.xlu0 %826
  %v829 = vmul.f32 %v823, %v827
  %v830 = vmul.f32 %v824, %v827
  %v831 = vadd.f32 %v813, %v829
  %v832 = vadd.f32 %v814, %v830
  %833 = vrot.lane.b32.xlu0 %v783, 48
  %v834 = vpop.permute.xlu0 %833
  %835 = vrot.lane.b32.xlu0 %v784, 48
  %v836 = vpop.permute.xlu0 %835
  %v837 = vsel %vm555, %v834, %v836
  %v838 = vsel %vm555, %v836, %v834
  %v839 = vmul.f32 %v838, %v558
  %v840 = vmul.f32 %v837, %v559
  %841 = vset.pattern.permute.xlu0 23
  %842 = vperm.xlu0 %841, %v20
  %v843 = vpop.permute.xlu0 %842
  %v845 = vmul.f32 %v839, %v843
  %v846 = vmul.f32 %v840, %v843
  %v847 = vadd.f32 %v831, %v845
  %v848 = vadd.f32 %v832, %v846
  %849 = vrot.lane.b32.xlu0 %v783, 80
  %v850 = vpop.permute.xlu0 %849
  %851 = vrot.lane.b32.xlu0 %v784, 80
  %v852 = vpop.permute.xlu0 %851
  %v853 = vsel %vm650, %v850, %v852
  %v854 = vsel %vm650, %v852, %v850
  %v855 = vmul.f32 %v853, %v653
  %v856 = vmul.f32 %v854, %v654
  %857 = vset.pattern.permute.xlu0 25
  %858 = vperm.xlu0 %857, %v20
  %v859 = vpop.permute.xlu0 %858
  %v861 = vmul.f32 %v855, %v859
  %v862 = vmul.f32 %v856, %v859
  %v863 = vadd.f32 %v847, %v861
  %v864 = vadd.f32 %v848, %v862
  %865 = vrot.lane.b32.xlu0 %v783, 32
  %v866 = vpop.permute.xlu0 %865
  %867 = vrot.lane.b32.xlu0 %v784, 32
  %v868 = vpop.permute.xlu0 %867
  %v869 = vsel %vm574, %v866, %v868
  %v870 = vsel %vm574, %v868, %v866
  %v871 = vperm.slane %v26, 2
  %v872 = vperm.slane %v27, 2
  %v873 = vmul.f32 %v869, %v871
  %v874 = vmul.f32 %v870, %v872
  %875 = vset.pattern.permute.xlu0 26
  %876 = vperm.xlu0 %875, %v20
  %v877 = vpop.permute.xlu0 %876
  %v879 = vmul.f32 %v873, %v877
  %v880 = vmul.f32 %v874, %v877
  %v881 = vadd.f32 %v863, %v879
  %v882 = vadd.f32 %v864, %v880
  %883 = vrot.lane.b32.xlu0 %v783, 112
  %v884 = vpop.permute.xlu0 %883
  %885 = vrot.lane.b32.xlu0 %v784, 112
  %v886 = vpop.permute.xlu0 %885
  %v887 = vsel %vm612, %v884, %v886
  %v888 = vsel %vm612, %v886, %v884
  %v889 = vperm.slane %v26, 3
  %v890 = vperm.slane %v27, 3
  %v891 = vmul.f32 %v888, %v889
  %v892 = vmul.f32 %v887, %v890
  %893 = vset.pattern.permute.xlu0 27
  %894 = vperm.xlu0 %893, %v20
  %v895 = vpop.permute.xlu0 %894
  %v897 = vmul.f32 %v891, %v895
  %v898 = vmul.f32 %v892, %v895
  %v899 = vadd.f32 %v881, %v897
  %v900 = vadd.f32 %v882, %v898
  %s901 = scalar_lea.vmem %s1, 8
  %v902 = vld [vmem:[%s901] sm:$0xff]
  %903 = vset.pattern.permute.xlu0 5
  %904 = vperm.xlu0 %903, %v21
  %v905 = vpop.permute.xlu0 %904
  %v908 = vsel %vm36, %v902, 0
  %910 = vmatpush.msra.mxu0 0.0
  %911 = vmatpush.msra.mxu0 0.0
  %912 = vmatpush.msra.mxu0 0.0
  %913 = vmatpush.msra.mxu0 0.0
  %914 = vmatpush.msra.mxu0 0.0
  %915 = vmatpush.msra.mxu0 0.0
  %916 = vmatpush.msra.mxu0 0.0
  %917 = vmatpush.msra.mxu0 0.0
  %918 = vmatpush.msra.mxu0 0.0
  %919 = vmatpush.msra.mxu0 0.0
  %920 = vmatpush.msra.mxu0 0.0
  %921 = vmatpush.msra.mxu0 0.0
  %922 = vmatpush.msra.mxu0 0.0
  %923 = vmatpush.msra.mxu0 0.0
  %924 = vmatpush.msra.mxu0 0.0
  %v925 = vand.u32 %v899, 4294901760
  %926 = vmatpush.msra.mxu0 %v925
  %v927 = vand.u32 %v908, 4294901760
  %v928 = vsub.f32 %v908, %v927
  %v929 = vand.u32 %v928, 4294901760
  %v930 = vsub.f32 %v928, %v929
  %v931 = vand.u32 %v930, 4294901760
  %932 = vmatmul.f32.gmra.mxu0 %v931
  %v933 = vpop.f32.mrf.mxu0
  %v934 = vadd.f32 %v905, %v933
  %935 = vdwg.mxu0
  %936 = vmatpush.msra.mxu0 0.0
  %937 = vmatpush.msra.mxu0 0.0
  %938 = vmatpush.msra.mxu0 0.0
  %939 = vmatpush.msra.mxu0 0.0
  %940 = vmatpush.msra.mxu0 0.0
  %941 = vmatpush.msra.mxu0 0.0
  %942 = vmatpush.msra.mxu0 0.0
  %943 = vmatpush.msra.mxu0 0.0
  %944 = vmatpush.msra.mxu0 0.0
  %945 = vmatpush.msra.mxu0 0.0
  %946 = vmatpush.msra.mxu0 0.0
  %947 = vmatpush.msra.mxu0 0.0
  %948 = vmatpush.msra.mxu0 0.0
  %949 = vmatpush.msra.mxu0 0.0
  %950 = vmatpush.msra.mxu0 0.0
  %v951 = vand.u32 %v899, 4294901760
  %v952 = vsub.f32 %v899, %v951
  %v953 = vand.u32 %v952, 4294901760
  %v954 = vsub.f32 %v952, %v953
  %v955 = vand.u32 %v954, 4294901760
  %956 = vmatpush.msra.mxu0 %v955
  %v957 = vand.u32 %v908, 4294901760
  %958 = vmatmul.f32.gmra.mxu0 %v957
  %v959 = vpop.f32.mrf.mxu0
  %v960 = vadd.f32 %v934, %v959
  %961 = vdwg.mxu0
  %962 = vmatpush.msra.mxu0 0.0
  %963 = vmatpush.msra.mxu0 0.0
  %964 = vmatpush.msra.mxu0 0.0
  %965 = vmatpush.msra.mxu0 0.0
  %966 = vmatpush.msra.mxu0 0.0
  %967 = vmatpush.msra.mxu0 0.0
  %968 = vmatpush.msra.mxu0 0.0
  %969 = vmatpush.msra.mxu0 0.0
  %970 = vmatpush.msra.mxu0 0.0
  %971 = vmatpush.msra.mxu0 0.0
  %972 = vmatpush.msra.mxu0 0.0
  %973 = vmatpush.msra.mxu0 0.0
  %974 = vmatpush.msra.mxu0 0.0
  %975 = vmatpush.msra.mxu0 0.0
  %976 = vmatpush.msra.mxu0 0.0
  %v977 = vand.u32 %v899, 4294901760
  %v978 = vsub.f32 %v899, %v977
  %979 = vmatpush.msra.mxu0 %v978
  %v980 = vand.u32 %v908, 4294901760
  %v981 = vsub.f32 %v908, %v980
  %982 = vmatmul.f32.gmra.mxu0 %v981
  %v983 = vpop.f32.mrf.mxu0
  %v984 = vadd.f32 %v960, %v983
  %985 = vdwg.mxu0
  %986 = vmatpush.msra.mxu0 0.0
  %987 = vmatpush.msra.mxu0 0.0
  %988 = vmatpush.msra.mxu0 0.0
  %989 = vmatpush.msra.mxu0 0.0
  %990 = vmatpush.msra.mxu0 0.0
  %991 = vmatpush.msra.mxu0 0.0
  %992 = vmatpush.msra.mxu0 0.0
  %993 = vmatpush.msra.mxu0 0.0
  %994 = vmatpush.msra.mxu0 0.0
  %995 = vmatpush.msra.mxu0 0.0
  %996 = vmatpush.msra.mxu0 0.0
  %997 = vmatpush.msra.mxu0 0.0
  %998 = vmatpush.msra.mxu0 0.0
  %999 = vmatpush.msra.mxu0 0.0
  %1000 = vmatpush.msra.mxu0 0.0
  %v1001 = vand.u32 %v899, 4294901760
  %1002 = vmatpush.msra.mxu0 %v1001
  %v1003 = vand.u32 %v908, 4294901760
  %v1004 = vsub.f32 %v908, %v1003
  %v1005 = vand.u32 %v1004, 4294901760
  %1006 = vmatmul.f32.gmra.mxu0 %v1005
  %v1007 = vpop.f32.mrf.mxu0
  %v1008 = vadd.f32 %v984, %v1007
  %1009 = vdwg.mxu0
  %1010 = vmatpush.msra.mxu0 0.0
  %1011 = vmatpush.msra.mxu0 0.0
  %1012 = vmatpush.msra.mxu0 0.0
  %1013 = vmatpush.msra.mxu0 0.0
  %1014 = vmatpush.msra.mxu0 0.0
  %1015 = vmatpush.msra.mxu0 0.0
  %1016 = vmatpush.msra.mxu0 0.0
  %1017 = vmatpush.msra.mxu0 0.0
  %1018 = vmatpush.msra.mxu0 0.0
  %1019 = vmatpush.msra.mxu0 0.0
  %1020 = vmatpush.msra.mxu0 0.0
  %1021 = vmatpush.msra.mxu0 0.0
  %1022 = vmatpush.msra.mxu0 0.0
  %1023 = vmatpush.msra.mxu0 0.0
  %1024 = vmatpush.msra.mxu0 0.0
  %v1025 = vand.u32 %v899, 4294901760
  %v1026 = vsub.f32 %v899, %v1025
  %v1027 = vand.u32 %v1026, 4294901760
  %1028 = vmatpush.msra.mxu0 %v1027
  %v1029 = vand.u32 %v908, 4294901760
  %1030 = vmatmul.f32.gmra.mxu0 %v1029
  %v1031 = vpop.f32.mrf.mxu0
  %v1032 = vadd.f32 %v1008, %v1031
  %1033 = vdwg.mxu0
  %1034 = vmatpush.msra.mxu0 0.0
  %1035 = vmatpush.msra.mxu0 0.0
  %1036 = vmatpush.msra.mxu0 0.0
  %1037 = vmatpush.msra.mxu0 0.0
  %1038 = vmatpush.msra.mxu0 0.0
  %1039 = vmatpush.msra.mxu0 0.0
  %1040 = vmatpush.msra.mxu0 0.0
  %1041 = vmatpush.msra.mxu0 0.0
  %1042 = vmatpush.msra.mxu0 0.0
  %1043 = vmatpush.msra.mxu0 0.0
  %1044 = vmatpush.msra.mxu0 0.0
  %1045 = vmatpush.msra.mxu0 0.0
  %1046 = vmatpush.msra.mxu0 0.0
  %1047 = vmatpush.msra.mxu0 0.0
  %1048 = vmatpush.msra.mxu0 0.0
  %v1049 = vand.u32 %v899, 4294901760
  %1050 = vmatpush.msra.mxu0 %v1049
  %v1051 = vand.u32 %v908, 4294901760
  %1052 = vmatmul.f32.gmra.mxu0 %v1051
  %v1053 = vpop.f32.mrf.mxu0
  %v1054 = vadd.f32 %v1032, %v1053
  %1055 = vdwg.mxu0
  %1056 = vmatpush.msra.mxu0 0.0
  %1057 = vmatpush.msra.mxu0 0.0
  %1058 = vmatpush.msra.mxu0 0.0
  %1059 = vmatpush.msra.mxu0 0.0
  %1060 = vmatpush.msra.mxu0 0.0
  %1061 = vmatpush.msra.mxu0 0.0
  %1062 = vmatpush.msra.mxu0 0.0
  %1063 = vmatpush.msra.mxu0 0.0
  %1064 = vmatpush.msra.mxu0 0.0
  %1065 = vmatpush.msra.mxu0 0.0
  %1066 = vmatpush.msra.mxu0 0.0
  %1067 = vmatpush.msra.mxu0 0.0
  %1068 = vmatpush.msra.mxu0 0.0
  %1069 = vmatpush.msra.mxu0 0.0
  %1070 = vmatpush.msra.mxu0 0.0
  %v1071 = vand.u32 %v900, 4294901760
  %1072 = vmatpush.msra.mxu0 %v1071
  %v1073 = vand.u32 %v908, 4294901760
  %v1074 = vsub.f32 %v908, %v1073
  %v1075 = vand.u32 %v1074, 4294901760
  %v1076 = vsub.f32 %v1074, %v1075
  %v1077 = vand.u32 %v1076, 4294901760
  %1078 = vmatmul.f32.gmra.mxu0 %v1077
  %v1079 = vpop.f32.mrf.mxu0
  %v1080 = vadd.f32 %v905, %v1079
  %1081 = vdwg.mxu0
  %1082 = vmatpush.msra.mxu0 0.0
  %1083 = vmatpush.msra.mxu0 0.0
  %1084 = vmatpush.msra.mxu0 0.0
  %1085 = vmatpush.msra.mxu0 0.0
  %1086 = vmatpush.msra.mxu0 0.0
  %1087 = vmatpush.msra.mxu0 0.0
  %1088 = vmatpush.msra.mxu0 0.0
  %1089 = vmatpush.msra.mxu0 0.0
  %1090 = vmatpush.msra.mxu0 0.0
  %1091 = vmatpush.msra.mxu0 0.0
  %1092 = vmatpush.msra.mxu0 0.0
  %1093 = vmatpush.msra.mxu0 0.0
  %1094 = vmatpush.msra.mxu0 0.0
  %1095 = vmatpush.msra.mxu0 0.0
  %1096 = vmatpush.msra.mxu0 0.0
  %v1097 = vand.u32 %v900, 4294901760
  %v1098 = vsub.f32 %v900, %v1097
  %v1099 = vand.u32 %v1098, 4294901760
  %v1100 = vsub.f32 %v1098, %v1099
  %v1101 = vand.u32 %v1100, 4294901760
  %1102 = vmatpush.msra.mxu0 %v1101
  %v1103 = vand.u32 %v908, 4294901760
  %1104 = vmatmul.f32.gmra.mxu0 %v1103
  %v1105 = vpop.f32.mrf.mxu0
  %v1106 = vadd.f32 %v1080, %v1105
  %1107 = vdwg.mxu0
  %1108 = vmatpush.msra.mxu0 0.0
  %1109 = vmatpush.msra.mxu0 0.0
  %1110 = vmatpush.msra.mxu0 0.0
  %1111 = vmatpush.msra.mxu0 0.0
  %1112 = vmatpush.msra.mxu0 0.0
  %1113 = vmatpush.msra.mxu0 0.0
  %1114 = vmatpush.msra.mxu0 0.0
  %1115 = vmatpush.msra.mxu0 0.0
  %1116 = vmatpush.msra.mxu0 0.0
  %1117 = vmatpush.msra.mxu0 0.0
  %1118 = vmatpush.msra.mxu0 0.0
  %1119 = vmatpush.msra.mxu0 0.0
  %1120 = vmatpush.msra.mxu0 0.0
  %1121 = vmatpush.msra.mxu0 0.0
  %1122 = vmatpush.msra.mxu0 0.0
  %v1123 = vand.u32 %v900, 4294901760
  %v1124 = vsub.f32 %v900, %v1123
  %1125 = vmatpush.msra.mxu0 %v1124
  %v1126 = vand.u32 %v908, 4294901760
  %v1127 = vsub.f32 %v908, %v1126
  %1128 = vmatmul.f32.gmra.mxu0 %v1127
  %v1129 = vpop.f32.mrf.mxu0
  %v1130 = vadd.f32 %v1106, %v1129
  %1131 = vdwg.mxu0
  %1132 = vmatpush.msra.mxu0 0.0
  %1133 = vmatpush.msra.mxu0 0.0
  %1134 = vmatpush.msra.mxu0 0.0
  %1135 = vmatpush.msra.mxu0 0.0
  %1136 = vmatpush.msra.mxu0 0.0
  %1137 = vmatpush.msra.mxu0 0.0
  %1138 = vmatpush.msra.mxu0 0.0
  %1139 = vmatpush.msra.mxu0 0.0
  %1140 = vmatpush.msra.mxu0 0.0
  %1141 = vmatpush.msra.mxu0 0.0
  %1142 = vmatpush.msra.mxu0 0.0
  %1143 = vmatpush.msra.mxu0 0.0
  %1144 = vmatpush.msra.mxu0 0.0
  %1145 = vmatpush.msra.mxu0 0.0
  %1146 = vmatpush.msra.mxu0 0.0
  %v1147 = vand.u32 %v900, 4294901760
  %1148 = vmatpush.msra.mxu0 %v1147
  %v1149 = vand.u32 %v908, 4294901760
  %v1150 = vsub.f32 %v908, %v1149
  %v1151 = vand.u32 %v1150, 4294901760
  %1152 = vmatmul.f32.gmra.mxu0 %v1151
  %v1153 = vpop.f32.mrf.mxu0
  %v1154 = vadd.f32 %v1130, %v1153
  %1155 = vdwg.mxu0
  %1156 = vmatpush.msra.mxu0 0.0
  %1157 = vmatpush.msra.mxu0 0.0
  %1158 = vmatpush.msra.mxu0 0.0
  %1159 = vmatpush.msra.mxu0 0.0
  %1160 = vmatpush.msra.mxu0 0.0
  %1161 = vmatpush.msra.mxu0 0.0
  %1162 = vmatpush.msra.mxu0 0.0
  %1163 = vmatpush.msra.mxu0 0.0
  %1164 = vmatpush.msra.mxu0 0.0
  %1165 = vmatpush.msra.mxu0 0.0
  %1166 = vmatpush.msra.mxu0 0.0
  %1167 = vmatpush.msra.mxu0 0.0
  %1168 = vmatpush.msra.mxu0 0.0
  %1169 = vmatpush.msra.mxu0 0.0
  %1170 = vmatpush.msra.mxu0 0.0
  %v1171 = vand.u32 %v900, 4294901760
  %v1172 = vsub.f32 %v900, %v1171
  %v1173 = vand.u32 %v1172, 4294901760
  %1174 = vmatpush.msra.mxu0 %v1173
  %v1175 = vand.u32 %v908, 4294901760
  %1176 = vmatmul.f32.gmra.mxu0 %v1175
  %v1177 = vpop.f32.mrf.mxu0
  %v1178 = vadd.f32 %v1154, %v1177
  %1179 = vdwg.mxu0
  %1180 = vmatpush.msra.mxu0 0.0
  %1181 = vmatpush.msra.mxu0 0.0
  %1182 = vmatpush.msra.mxu0 0.0
  %1183 = vmatpush.msra.mxu0 0.0
  %1184 = vmatpush.msra.mxu0 0.0
  %1185 = vmatpush.msra.mxu0 0.0
  %1186 = vmatpush.msra.mxu0 0.0
  %1187 = vmatpush.msra.mxu0 0.0
  %1188 = vmatpush.msra.mxu0 0.0
  %1189 = vmatpush.msra.mxu0 0.0
  %1190 = vmatpush.msra.mxu0 0.0
  %1191 = vmatpush.msra.mxu0 0.0
  %1192 = vmatpush.msra.mxu0 0.0
  %1193 = vmatpush.msra.mxu0 0.0
  %1194 = vmatpush.msra.mxu0 0.0
  %v1195 = vand.u32 %v900, 4294901760
  %1196 = vmatpush.msra.mxu0 %v1195
  %v1197 = vand.u32 %v908, 4294901760
  %1198 = vmatmul.f32.gmra.mxu0 %v1197
  %v1199 = vpop.f32.mrf.mxu0
  %v1200 = vadd.f32 %v1178, %v1199
  %1201 = vdwg.mxu0
  %v1202 = vmul.f32 %v408, %v1054
  %v1203 = vmul.f32 %v409, %v1200
  %s1204 = scalar_lea.vmem %s1, 16
  %v1205 = vld [vmem:[%s1204] sm:$0xff]
  %1206 = vset.pattern.permute.xlu0 6
  %1207 = vperm.xlu0 %1206, %v21
  %v1208 = vpop.permute.xlu0 %1207
  %v1211 = vsel %vm36, %v1205, 0
  %1213 = vmatpush.msra.mxu0 0.0
  %1214 = vmatpush.msra.mxu0 0.0
  %1215 = vmatpush.msra.mxu0 0.0
  %1216 = vmatpush.msra.mxu0 0.0
  %1217 = vmatpush.msra.mxu0 0.0
  %1218 = vmatpush.msra.mxu0 0.0
  %1219 = vmatpush.msra.mxu0 0.0
  %1220 = vmatpush.msra.mxu0 0.0
  %1221 = vmatpush.msra.mxu0 0.0
  %1222 = vmatpush.msra.mxu0 0.0
  %1223 = vmatpush.msra.mxu0 0.0
  %1224 = vmatpush.msra.mxu0 0.0
  %1225 = vmatpush.msra.mxu0 0.0
  %1226 = vmatpush.msra.mxu0 0.0
  %1227 = vmatpush.msra.mxu0 0.0
  %v1228 = vand.u32 %v1202, 4294901760
  %1229 = vmatpush.msra.mxu0 %v1228
  %v1230 = vand.u32 %v1211, 4294901760
  %v1231 = vsub.f32 %v1211, %v1230
  %v1232 = vand.u32 %v1231, 4294901760
  %v1233 = vsub.f32 %v1231, %v1232
  %v1234 = vand.u32 %v1233, 4294901760
  %1235 = vmatmul.f32.gmra.mxu0 %v1234
  %v1236 = vpop.f32.mrf.mxu0
  %v1237 = vadd.f32 %v1208, %v1236
  %1238 = vdwg.mxu0
  %1239 = vmatpush.msra.mxu0 0.0
  %1240 = vmatpush.msra.mxu0 0.0
  %1241 = vmatpush.msra.mxu0 0.0
  %1242 = vmatpush.msra.mxu0 0.0
  %1243 = vmatpush.msra.mxu0 0.0
  %1244 = vmatpush.msra.mxu0 0.0
  %1245 = vmatpush.msra.mxu0 0.0
  %1246 = vmatpush.msra.mxu0 0.0
  %1247 = vmatpush.msra.mxu0 0.0
  %1248 = vmatpush.msra.mxu0 0.0
  %1249 = vmatpush.msra.mxu0 0.0
  %1250 = vmatpush.msra.mxu0 0.0
  %1251 = vmatpush.msra.mxu0 0.0
  %1252 = vmatpush.msra.mxu0 0.0
  %1253 = vmatpush.msra.mxu0 0.0
  %v1254 = vand.u32 %v1202, 4294901760
  %v1255 = vsub.f32 %v1202, %v1254
  %v1256 = vand.u32 %v1255, 4294901760
  %v1257 = vsub.f32 %v1255, %v1256
  %v1258 = vand.u32 %v1257, 4294901760
  %1259 = vmatpush.msra.mxu0 %v1258
  %v1260 = vand.u32 %v1211, 4294901760
  %1261 = vmatmul.f32.gmra.mxu0 %v1260
  %v1262 = vpop.f32.mrf.mxu0
  %v1263 = vadd.f32 %v1237, %v1262
  %1264 = vdwg.mxu0
  %1265 = vmatpush.msra.mxu0 0.0
  %1266 = vmatpush.msra.mxu0 0.0
  %1267 = vmatpush.msra.mxu0 0.0
  %1268 = vmatpush.msra.mxu0 0.0
  %1269 = vmatpush.msra.mxu0 0.0
  %1270 = vmatpush.msra.mxu0 0.0
  %1271 = vmatpush.msra.mxu0 0.0
  %1272 = vmatpush.msra.mxu0 0.0
  %1273 = vmatpush.msra.mxu0 0.0
  %1274 = vmatpush.msra.mxu0 0.0
  %1275 = vmatpush.msra.mxu0 0.0
  %1276 = vmatpush.msra.mxu0 0.0
  %1277 = vmatpush.msra.mxu0 0.0
  %1278 = vmatpush.msra.mxu0 0.0
  %1279 = vmatpush.msra.mxu0 0.0
  %v1280 = vand.u32 %v1202, 4294901760
  %v1281 = vsub.f32 %v1202, %v1280
  %1282 = vmatpush.msra.mxu0 %v1281
  %v1283 = vand.u32 %v1211, 4294901760
  %v1284 = vsub.f32 %v1211, %v1283
  %1285 = vmatmul.f32.gmra.mxu0 %v1284
  %v1286 = vpop.f32.mrf.mxu0
  %v1287 = vadd.f32 %v1263, %v1286
  %1288 = vdwg.mxu0
  %1289 = vmatpush.msra.mxu0 0.0
  %1290 = vmatpush.msra.mxu0 0.0
  %1291 = vmatpush.msra.mxu0 0.0
  %1292 = vmatpush.msra.mxu0 0.0
  %1293 = vmatpush.msra.mxu0 0.0
  %1294 = vmatpush.msra.mxu0 0.0
  %1295 = vmatpush.msra.mxu0 0.0
  %1296 = vmatpush.msra.mxu0 0.0
  %1297 = vmatpush.msra.mxu0 0.0
  %1298 = vmatpush.msra.mxu0 0.0
  %1299 = vmatpush.msra.mxu0 0.0
  %1300 = vmatpush.msra.mxu0 0.0
  %1301 = vmatpush.msra.mxu0 0.0
  %1302 = vmatpush.msra.mxu0 0.0
  %1303 = vmatpush.msra.mxu0 0.0
  %v1304 = vand.u32 %v1202, 4294901760
  %1305 = vmatpush.msra.mxu0 %v1304
  %v1306 = vand.u32 %v1211, 4294901760
  %v1307 = vsub.f32 %v1211, %v1306
  %v1308 = vand.u32 %v1307, 4294901760
  %1309 = vmatmul.f32.gmra.mxu0 %v1308
  %v1310 = vpop.f32.mrf.mxu0
  %v1311 = vadd.f32 %v1287, %v1310
  %1312 = vdwg.mxu0
  %1313 = vmatpush.msra.mxu0 0.0
  %1314 = vmatpush.msra.mxu0 0.0
  %1315 = vmatpush.msra.mxu0 0.0
  %1316 = vmatpush.msra.mxu0 0.0
  %1317 = vmatpush.msra.mxu0 0.0
  %1318 = vmatpush.msra.mxu0 0.0
  %1319 = vmatpush.msra.mxu0 0.0
  %1320 = vmatpush.msra.mxu0 0.0
  %1321 = vmatpush.msra.mxu0 0.0
  %1322 = vmatpush.msra.mxu0 0.0
  %1323 = vmatpush.msra.mxu0 0.0
  %1324 = vmatpush.msra.mxu0 0.0
  %1325 = vmatpush.msra.mxu0 0.0
  %1326 = vmatpush.msra.mxu0 0.0
  %1327 = vmatpush.msra.mxu0 0.0
  %v1328 = vand.u32 %v1202, 4294901760
  %v1329 = vsub.f32 %v1202, %v1328
  %v1330 = vand.u32 %v1329, 4294901760
  %1331 = vmatpush.msra.mxu0 %v1330
  %v1332 = vand.u32 %v1211, 4294901760
  %1333 = vmatmul.f32.gmra.mxu0 %v1332
  %v1334 = vpop.f32.mrf.mxu0
  %v1335 = vadd.f32 %v1311, %v1334
  %1336 = vdwg.mxu0
  %1337 = vmatpush.msra.mxu0 0.0
  %1338 = vmatpush.msra.mxu0 0.0
  %1339 = vmatpush.msra.mxu0 0.0
  %1340 = vmatpush.msra.mxu0 0.0
  %1341 = vmatpush.msra.mxu0 0.0
  %1342 = vmatpush.msra.mxu0 0.0
  %1343 = vmatpush.msra.mxu0 0.0
  %1344 = vmatpush.msra.mxu0 0.0
  %1345 = vmatpush.msra.mxu0 0.0
  %1346 = vmatpush.msra.mxu0 0.0
  %1347 = vmatpush.msra.mxu0 0.0
  %1348 = vmatpush.msra.mxu0 0.0
  %1349 = vmatpush.msra.mxu0 0.0
  %1350 = vmatpush.msra.mxu0 0.0
  %1351 = vmatpush.msra.mxu0 0.0
  %v1352 = vand.u32 %v1202, 4294901760
  %1353 = vmatpush.msra.mxu0 %v1352
  %v1354 = vand.u32 %v1211, 4294901760
  %1355 = vmatmul.f32.gmra.mxu0 %v1354
  %v1356 = vpop.f32.mrf.mxu0
  %v1357 = vadd.f32 %v1335, %v1356
  %1358 = vdwg.mxu0
  %1359 = vmatpush.msra.mxu0 0.0
  %1360 = vmatpush.msra.mxu0 0.0
  %1361 = vmatpush.msra.mxu0 0.0
  %1362 = vmatpush.msra.mxu0 0.0
  %1363 = vmatpush.msra.mxu0 0.0
  %1364 = vmatpush.msra.mxu0 0.0
  %1365 = vmatpush.msra.mxu0 0.0
  %1366 = vmatpush.msra.mxu0 0.0
  %1367 = vmatpush.msra.mxu0 0.0
  %1368 = vmatpush.msra.mxu0 0.0
  %1369 = vmatpush.msra.mxu0 0.0
  %1370 = vmatpush.msra.mxu0 0.0
  %1371 = vmatpush.msra.mxu0 0.0
  %1372 = vmatpush.msra.mxu0 0.0
  %1373 = vmatpush.msra.mxu0 0.0
  %v1374 = vand.u32 %v1203, 4294901760
  %1375 = vmatpush.msra.mxu0 %v1374
  %v1376 = vand.u32 %v1211, 4294901760
  %v1377 = vsub.f32 %v1211, %v1376
  %v1378 = vand.u32 %v1377, 4294901760
  %v1379 = vsub.f32 %v1377, %v1378
  %v1380 = vand.u32 %v1379, 4294901760
  %1381 = vmatmul.f32.gmra.mxu0 %v1380
  %v1382 = vpop.f32.mrf.mxu0
  %v1383 = vadd.f32 %v1208, %v1382
  %1384 = vdwg.mxu0
  %1385 = vmatpush.msra.mxu0 0.0
  %1386 = vmatpush.msra.mxu0 0.0
  %1387 = vmatpush.msra.mxu0 0.0
  %1388 = vmatpush.msra.mxu0 0.0
  %1389 = vmatpush.msra.mxu0 0.0
  %1390 = vmatpush.msra.mxu0 0.0
  %1391 = vmatpush.msra.mxu0 0.0
  %1392 = vmatpush.msra.mxu0 0.0
  %1393 = vmatpush.msra.mxu0 0.0
  %1394 = vmatpush.msra.mxu0 0.0
  %1395 = vmatpush.msra.mxu0 0.0
  %1396 = vmatpush.msra.mxu0 0.0
  %1397 = vmatpush.msra.mxu0 0.0
  %1398 = vmatpush.msra.mxu0 0.0
  %1399 = vmatpush.msra.mxu0 0.0
  %v1400 = vand.u32 %v1203, 4294901760
  %v1401 = vsub.f32 %v1203, %v1400
  %v1402 = vand.u32 %v1401, 4294901760
  %v1403 = vsub.f32 %v1401, %v1402
  %v1404 = vand.u32 %v1403, 4294901760
  %1405 = vmatpush.msra.mxu0 %v1404
  %v1406 = vand.u32 %v1211, 4294901760
  %1407 = vmatmul.f32.gmra.mxu0 %v1406
  %v1408 = vpop.f32.mrf.mxu0
  %v1409 = vadd.f32 %v1383, %v1408
  %1410 = vdwg.mxu0
  %1411 = vmatpush.msra.mxu0 0.0
  %1412 = vmatpush.msra.mxu0 0.0
  %1413 = vmatpush.msra.mxu0 0.0
  %1414 = vmatpush.msra.mxu0 0.0
  %1415 = vmatpush.msra.mxu0 0.0
  %1416 = vmatpush.msra.mxu0 0.0
  %1417 = vmatpush.msra.mxu0 0.0
  %1418 = vmatpush.msra.mxu0 0.0
  %1419 = vmatpush.msra.mxu0 0.0
  %1420 = vmatpush.msra.mxu0 0.0
  %1421 = vmatpush.msra.mxu0 0.0
  %1422 = vmatpush.msra.mxu0 0.0
  %1423 = vmatpush.msra.mxu0 0.0
  %1424 = vmatpush.msra.mxu0 0.0
  %1425 = vmatpush.msra.mxu0 0.0
  %v1426 = vand.u32 %v1203, 4294901760
  %v1427 = vsub.f32 %v1203, %v1426
  %1428 = vmatpush.msra.mxu0 %v1427
  %v1429 = vand.u32 %v1211, 4294901760
  %v1430 = vsub.f32 %v1211, %v1429
  %1431 = vmatmul.f32.gmra.mxu0 %v1430
  %v1432 = vpop.f32.mrf.mxu0
  %v1433 = vadd.f32 %v1409, %v1432
  %1434 = vdwg.mxu0
  %1435 = vmatpush.msra.mxu0 0.0
  %1436 = vmatpush.msra.mxu0 0.0
  %1437 = vmatpush.msra.mxu0 0.0
  %1438 = vmatpush.msra.mxu0 0.0
  %1439 = vmatpush.msra.mxu0 0.0
  %1440 = vmatpush.msra.mxu0 0.0
  %1441 = vmatpush.msra.mxu0 0.0
  %1442 = vmatpush.msra.mxu0 0.0
  %1443 = vmatpush.msra.mxu0 0.0
  %1444 = vmatpush.msra.mxu0 0.0
  %1445 = vmatpush.msra.mxu0 0.0
  %1446 = vmatpush.msra.mxu0 0.0
  %1447 = vmatpush.msra.mxu0 0.0
  %1448 = vmatpush.msra.mxu0 0.0
  %1449 = vmatpush.msra.mxu0 0.0
  %v1450 = vand.u32 %v1203, 4294901760
  %1451 = vmatpush.msra.mxu0 %v1450
  %v1452 = vand.u32 %v1211, 4294901760
  %v1453 = vsub.f32 %v1211, %v1452
  %v1454 = vand.u32 %v1453, 4294901760
  %1455 = vmatmul.f32.gmra.mxu0 %v1454
  %v1456 = vpop.f32.mrf.mxu0
  %v1457 = vadd.f32 %v1433, %v1456
  %1458 = vdwg.mxu0
  %1459 = vmatpush.msra.mxu0 0.0
  %1460 = vmatpush.msra.mxu0 0.0
  %1461 = vmatpush.msra.mxu0 0.0
  %1462 = vmatpush.msra.mxu0 0.0
  %1463 = vmatpush.msra.mxu0 0.0
  %1464 = vmatpush.msra.mxu0 0.0
  %1465 = vmatpush.msra.mxu0 0.0
  %1466 = vmatpush.msra.mxu0 0.0
  %1467 = vmatpush.msra.mxu0 0.0
  %1468 = vmatpush.msra.mxu0 0.0
  %1469 = vmatpush.msra.mxu0 0.0
  %1470 = vmatpush.msra.mxu0 0.0
  %1471 = vmatpush.msra.mxu0 0.0
  %1472 = vmatpush.msra.mxu0 0.0
  %1473 = vmatpush.msra.mxu0 0.0
  %v1474 = vand.u32 %v1203, 4294901760
  %v1475 = vsub.f32 %v1203, %v1474
  %v1476 = vand.u32 %v1475, 4294901760
  %1477 = vmatpush.msra.mxu0 %v1476
  %v1478 = vand.u32 %v1211, 4294901760
  %1479 = vmatmul.f32.gmra.mxu0 %v1478
  %v1480 = vpop.f32.mrf.mxu0
  %v1481 = vadd.f32 %v1457, %v1480
  %1482 = vdwg.mxu0
  %1483 = vmatpush.msra.mxu0 0.0
  %1484 = vmatpush.msra.mxu0 0.0
  %1485 = vmatpush.msra.mxu0 0.0
  %1486 = vmatpush.msra.mxu0 0.0
  %1487 = vmatpush.msra.mxu0 0.0
  %1488 = vmatpush.msra.mxu0 0.0
  %1489 = vmatpush.msra.mxu0 0.0
  %1490 = vmatpush.msra.mxu0 0.0
  %1491 = vmatpush.msra.mxu0 0.0
  %1492 = vmatpush.msra.mxu0 0.0
  %1493 = vmatpush.msra.mxu0 0.0
  %1494 = vmatpush.msra.mxu0 0.0
  %1495 = vmatpush.msra.mxu0 0.0
  %1496 = vmatpush.msra.mxu0 0.0
  %1497 = vmatpush.msra.mxu0 0.0
  %v1498 = vand.u32 %v1203, 4294901760
  %1499 = vmatpush.msra.mxu0 %v1498
  %v1500 = vand.u32 %v1211, 4294901760
  %1501 = vmatmul.f32.gmra.mxu0 %v1500
  %v1502 = vpop.f32.mrf.mxu0
  %v1503 = vadd.f32 %v1481, %v1502
  %1504 = vdwg.mxu0
  %1505 = vst [vmem:[%s5] sm:$0xff] %v1357
  %1506 = vst [vmem:[%s5 + $0x8] sm:$0xff] %v1503
  // Predicated region
  $region22: #{lskat_apply.1} parent=0 // pred_check
    _
  $region23: #{lskat_apply.1} parent=0 // pred_check_branch
    %1508 = sbr.rel (0) target = $region25
  $region24: #{lskat_apply.1} parent=0 // pred_region
    _
  $region25: #{lskat_apply.1} parent=0 // pred_fallthru
    _
  // Predicated region
  $region26: #{lskat_apply.1} parent=0 // pred_check
    _
  $region27: #{lskat_apply.1} parent=0 // pred_check_branch
    %1510 = sbr.rel (0) target = $region29
  $region28: #{lskat_apply.1} parent=0 // pred_region
    _
  $region29: #{lskat_apply.1} parent=0 // pred_fallthru
    _

</llo_original>
